<compile_context>
chip_gen: v7x
topology: tpu7x:2x2x1
jax: 0.10.0
libtpu: 0.0.40
codegen_flags: <defaults>
</compile_context>

<pallas_src>
import numpy as np
import jax
import jax.numpy as jnp
from jax.experimental import pallas as pl
from jax.experimental.pallas import tpu as pltpu


# ----------------------------- fused bottleneck kernel -----------------------------

def _make_bottleneck_kernel(st, has_ds, Hc, Wc, Cin, C4, Cout):
    """Kernel for one fused Bottleneck block; one batch element per grid step."""
    Ho, Wo = Hc // st, Wc // st
    L1, L2, L3 = Wc * C4, Wo * C4, Wo * Cout
    f32 = jnp.float32

    def mm(a, b):
        return jnp.dot(a, b, preferred_element_type=f32)

    def kernel(*refs):
        if has_ds:
            (x_ref, w1_ref, t0_ref, t1_ref, t2_ref, w3_ref, wds_ref, b_ref,
             o_ref, pad_ref) = refs
        else:
            (x_ref, w1_ref, t0_ref, t1_ref, t2_ref, w3_ref, b_ref,
             o_ref, pad_ref) = refs
            wds_ref = None

        b1 = b_ref[0:1, 0:L1]
        b2 = b_ref[1:2, 0:L2]
        b3 = b_ref[2:3, 0:L3]

        if st == 1:
            # x_ref: (Hc, Wc*Cin)
            x2d = x_ref[...]
            y1 = mm(x2d, w1_ref[...]) + b1                        # (Hc, L1)
            pad_ref[...] = jnp.zeros((Hc + 2, L1), f32)           # zero rows = conv padding
            pad_ref[1:Hc + 1, :] = y1
            y2 = (mm(pad_ref[0:Hc, :],     t0_ref[...]) +
                  mm(pad_ref[1:Hc + 1, :], t1_ref[...]) +
                  mm(pad_ref[2:Hc + 2, :], t2_ref[...])) + b2      # (Hc, L2)
            res_src = x2d
        else:
            # x_ref: (2, Ho, Wc*Cin): row-parity split (plane 0 = even rows, 1 = odd rows)
            xe = x_ref[0]
            xo = x_ref[1]
            y1e = mm(xe, w1_ref[...]) + b1                        # y1 on even rows
            y1o = mm(xo, w1_ref[...]) + b1                        # y1 on odd rows
            pad_ref[...] = jnp.zeros((Ho + 1, L1), f32)
            pad_ref[1:Ho + 1, :] = y1o                            # padded even row-planes
            y2 = (mm(pad_ref[0:Ho, :],     t0_ref[...]) +         # tap dh=0 -> rows 2i
                  mm(y1e,                  t1_ref[...]) +         # tap dh=1 -> rows 2i+1
                  mm(pad_ref[1:Ho + 1, :], t2_ref[...])) + b2      # tap dh=2 -> rows 2i+2
            res_src = xe

        y3 = jnp.maximum(mm(y2, w3_ref[...]) + b3, 0.0)            # relu(bn3(conv3(.)))

        if has_ds:
            bds = b_ref[3:4, 0:L3]
            res = mm(res_src, wds_ref[...]) + bds                  # bn_ds(conv1x1_ds(x))
        else:
            res = res_src                                          # identity (Cin == Cout, st == 1)

        o_ref[...] = y3 + res

    return kernel


def bottleneck_forward(x2d, kern, meta):
    """x2d: (N, Hc, Wc*Cin) -> (N, Ho, Wo*Cout); whole block in one pallas_call."""
    N = x2d.shape[0]
    Hc, Wc, Cin, C4, Cout = meta['Hc'], meta['Wc'], meta['Cin'], meta['C4'], meta['Cout']
    st, has_ds = meta['stride'], meta['has_ds']
    Ho, Wo = Hc // st, Wc // st
    LX, L1, L3 = Wc * Cin, Wc * C4, Wo * Cout

    if st == 2:
        # wrapper-side row-parity split: (N, 2, Ho, Wc*Cin)
        x_in = x2d.reshape(N, Ho, 2, LX).transpose(0, 2, 1, 3)
        x_spec = pl.BlockSpec((None, 2, Ho, LX), lambda b: (b, 0, 0, 0))
        pad_scratch = pltpu.VMEM((Ho + 1, L1), jnp.float32)
    else:
        x_in = x2d
        x_spec = pl.BlockSpec((None, Hc, LX), lambda b: (b, 0, 0))
        pad_scratch = pltpu.VMEM((Hc + 2, L1), jnp.float32)

    w_list = [kern['W1b'], kern['T0'], kern['T1'], kern['T2'], kern['W3b']]
    if has_ds:
        w_list.append(kern['Wdsb'])
    w_list.append(kern['bias_pack'])

    in_specs = [x_spec] + [pl.BlockSpec(w.shape, lambda b: (0, 0)) for w in w_list]

    kernel = _make_bottleneck_kernel(st, has_ds, Hc, Wc, Cin, C4, Cout)
    return pl.pallas_call(
        kernel,
        out_shape=jax.ShapeDtypeStruct((N, Ho, L3), jnp.float32),
        grid=(N,),
        in_specs=in_specs,
        out_specs=pl.BlockSpec((None, Ho, L3), lambda b: (b, 0, 0)),
        scratch_shapes=[pad_scratch],
        compiler_params=pltpu.CompilerParams(dimension_semantics=("parallel",)),
    )(x_in, *w_list)


def resnet_layer_forward(x_nhwc, blocks):
    N, H, W, C = x_nhwc.shape
    x = x_nhwc.reshape(N, H, W * C)
    for kern, meta in blocks:
        x = bottleneck_forward(x, kern, meta)
    meta = blocks[-1][1]
    Hf, Wf = meta['Hc'] // meta['stride'], meta['Wc'] // meta['stride']
    return x.reshape(N, Hf, Wf, meta['Cout'])


# ----------------------------- params & init-time weight folding -----------------------------

def fold_bn(gamma, beta, mean, var, eps=1e-5):
    scale = gamma / jnp.sqrt(var + eps)
    bias = beta - mean * scale
    return scale.astype(jnp.float32), bias.astype(jnp.float32)


def init_bottleneck_params(key, cin, cout, downsampling, first_layer):
    c4 = cout // 4
    keys = jax.random.split(key, 8)

    def bn_params(k, c):
        k1, k2, k3, k4 = jax.random.split(k, 4)
        gamma = jax.random.uniform(k1, (c,), minval=0.5, maxval=1.5)
        beta = jax.random.normal(k2, (c,)) * 0.1
        mean = jax.random.normal(k3, (c,)) * 0.1
        var = jax.random.uniform(k4, (c,), minval=0.5, maxval=1.5)
        return fold_bn(gamma, beta, mean, var)

    p = {
        'w1': (jax.random.normal(keys[0], (cin, c4)) / jnp.sqrt(cin)).astype(jnp.float32),
        'bn1': bn_params(keys[1], c4),
        'w2': (jax.random.normal(keys[2], (3, 3, c4, c4)) / jnp.sqrt(9 * c4)).astype(jnp.float32),
        'bn2': bn_params(keys[3], c4),
        'w3': (jax.random.normal(keys[4], (c4, cout)) / jnp.sqrt(c4)).astype(jnp.float32),
        'bn3': bn_params(keys[5], cout),
        'stride': 2 if downsampling else 1,
        'has_ds': bool(downsampling or first_layer),
    }
    if p['has_ds']:
        p['w_ds'] = (jax.random.normal(keys[6], (cin, cout)) / jnp.sqrt(cin)).astype(jnp.float32)
        p['bn_ds'] = bn_params(keys[7], cout)
        p['ds_stride'] = 1 if first_layer else 2
    return p


def build_kernel_block(raw, Hc, Wc):
    """Fold BN scales into the conv weights and build the width-major block-structured
    matrices consumed by the fused kernel (done ONCE, at init time)."""
    Cin, C4 = raw['w1'].shape
    Cout = raw['w3'].shape[1]
    st = raw['stride']
    has_ds = raw['has_ds']
    Ho, Wo = Hc // st, Wc // st
    L1, L2, L3 = Wc * C4, Wo * C4, Wo * Cout

    s1, b1 = (np.asarray(a) for a in raw['bn1'])
    s2, b2 = (np.asarray(a) for a in raw['bn2'])
    s3, b3 = (np.asarray(a) for a in raw['bn3'])
    w1 = np.asarray(raw['w1']) * s1[None, :]
    w2 = np.asarray(raw['w2']) * s2[None, None, None, :]
    w3 = np.asarray(raw['w3']) * s3[None, :]

    # 1x1 convs on the (H, W*C) layout == block-diagonal matmuls.
    W1b = np.kron(np.eye(Wc, dtype=np.float32), w1).astype(np.float32)
    W3b = np.kron(np.eye(Wo, dtype=np.float32), w3).astype(np.float32)

    # 3x3 conv (pad=1, stride st) == sum of 3 row-tap Toeplitz-structured matmuls.
    T = np.zeros((3, L1, L2), np.float32)
    for dh in range(3):
        for j in range(Wo):
            for dw in range(3):
                w = st * j + dw - 1
                if 0 <= w < Wc:
                    T[dh, w * C4:(w + 1) * C4, j * C4:(j + 1) * C4] = w2[dh, dw]

    bias_pack = np.zeros((4, L3), np.float32)
    bias_pack[0, :L1] = np.tile(b1, Wc)
    bias_pack[1, :L2] = np.tile(b2, Wo)
    bias_pack[2, :L3] = np.tile(b3, Wo)

    kern = {
        'W1b': jnp.asarray(W1b),
        'T0': jnp.asarray(T[0]), 'T1': jnp.asarray(T[1]), 'T2': jnp.asarray(T[2]),
        'W3b': jnp.asarray(W3b),
    }

    if has_ds:
        assert raw['ds_stride'] == st, "main-path stride and downsample stride must agree"
        s_ds, b_ds = (np.asarray(a) for a in raw['bn_ds'])
        wds = np.asarray(raw['w_ds']) * s_ds[None, :]
        Wdsb = np.zeros((Wc * Cin, L3), np.float32)
        for j in range(Wo):
            Wdsb[(st * j) * Cin:(st * j + 1) * Cin, j * Cout:(j + 1) * Cout] = wds
        kern['Wdsb'] = jnp.asarray(Wdsb)
        bias_pack[3, :L3] = np.tile(b_ds, Wo)
    else:
        assert st == 1 and Cin == Cout

    kern['bias_pack'] = jnp.asarray(bias_pack)
    meta = {'Hc': Hc, 'Wc': Wc, 'Cin': Cin, 'C4': C4, 'Cout': Cout,
            'stride': st, 'has_ds': has_ds}
    return kern, meta


# ----------------------------- plain-JAX reference -----------------------------

def ref_bottleneck(x, p):
    def conv1x1(x, w, stride=1):
        return jax.lax.conv_general_dilated(
            x, w[None, None], (stride, stride), 'VALID',
            dimension_numbers=('NHWC', 'HWIO', 'NHWC'))

    def conv3x3(x, w, stride):
        return jax.lax.conv_general_dilated(
            x, w, (stride, stride), ((1, 1), (1, 1)),
            dimension_numbers=('NHWC', 'HWIO', 'NHWC'))

    def bn(x, sb):
        s, b = sb
        return x * s + b

    y = bn(conv1x1(x, p['w1']), p['bn1'])
    y = bn(conv3x3(y, p['w2'], p['stride']), p['bn2'])
    y = bn(conv1x1(y, p['w3']), p['bn3'])
    y = jnp.maximum(y, 0.0)
    if p['has_ds']:
        res = bn(conv1x1(x, p['w_ds'], p['ds_stride']), p['bn_ds'])
    else:
        res = x
    return y + res


# ----------------------------- main -----------------------------

if __name__ == "__main__":
    key = jax.random.PRNGKey(0)
    k_x, k_p = jax.random.split(key)

    # ResNetLayer(input_filters=16, output_filters=32, num_blocks=2,
    #             downsampling=True, first_layer=False) on NHWC input (2, 16, 16, 16).
    input_filters, output_filters, num_blocks = 16, 32, 2
    N, H, W = 2, 16, 16

    x = jax.random.normal(k_x, (N, H, W, input_filters), dtype=jnp.float32)

    pkeys = jax.random.split(k_p, num_blocks)
    raw_list, blocks = [], []
    h, w, cin = H, W, input_filters
    for i in range(num_blocks):
        if i == 0:
            raw = init_bottleneck_params(pkeys[i], cin, output_filters,
                                         downsampling=True, first_layer=False)
        else:
            raw = init_bottleneck_params(pkeys[i], cin, output_filters,
                                         downsampling=False, first_layer=False)
        kern, meta = build_kernel_block(raw, h, w)
        raw_list.append(raw)
        blocks.append((kern, meta))
        h //= raw['stride']
        w //= raw['stride']
        cin = output_filters

    fwd = jax.jit(lambda xx: resnet_layer_forward(xx, blocks))
    out = jax.block_until_ready(fwd(x))

    ref = x
    for raw in raw_list:
        ref = ref_bottleneck(ref, raw)
    ref = jax.block_until_ready(ref)

    assert out.shape == ref.shape, (out.shape, ref.shape)
    err = float(jnp.max(jnp.abs(out - ref)))
    assert jnp.allclose(out, ref, atol=1e-3, rtol=1e-3), err

    print("KERNEL_OK")
</pallas_src>

<mosaic_0001>
module attributes {stable_mosaic.version = 11 : i64} {
  func.func @kernel(%arg0: i32, %arg1: memref<1x2x8x256xf32, #tpu.memory_space<vmem>>, %arg2: memref<256x128xf32, #tpu.memory_space<vmem>>, %arg3: memref<128x64xf32, #tpu.memory_space<vmem>>, %arg4: memref<128x64xf32, #tpu.memory_space<vmem>>, %arg5: memref<128x64xf32, #tpu.memory_space<vmem>>, %arg6: memref<64x256xf32, #tpu.memory_space<vmem>>, %arg7: memref<256x256xf32, #tpu.memory_space<vmem>>, %arg8: memref<4x256xf32, #tpu.memory_space<vmem>>, %arg9: memref<1x8x256xf32, #tpu.memory_space<vmem>>, %arg10: memref<9x128xf32, #tpu.memory_space<vmem>>) attributes {dimension_semantics = [#tpu.dimension_semantics<parallel>], iteration_bounds = array<i64: 2>, scalar_prefetch = 0 : i64, scratch_operands = 1 : i64, tpu.core_type = #tpu.core_type<tc>, window_params = [{transform_indices = @transform_0, window_bounds = array<i64: 1, 2, 8, 256>}, {pipeline_mode = #tpu.pipeline_mode<synchronous>, transform_indices = @transform_1, window_bounds = array<i64: 256, 128>}, {pipeline_mode = #tpu.pipeline_mode<synchronous>, transform_indices = @transform_2, window_bounds = array<i64: 128, 64>}, {pipeline_mode = #tpu.pipeline_mode<synchronous>, transform_indices = @transform_3, window_bounds = array<i64: 128, 64>}, {pipeline_mode = #tpu.pipeline_mode<synchronous>, transform_indices = @transform_4, window_bounds = array<i64: 128, 64>}, {pipeline_mode = #tpu.pipeline_mode<synchronous>, transform_indices = @transform_5, window_bounds = array<i64: 64, 256>}, {pipeline_mode = #tpu.pipeline_mode<synchronous>, transform_indices = @transform_6, window_bounds = array<i64: 256, 256>}, {pipeline_mode = #tpu.pipeline_mode<synchronous>, transform_indices = @transform_7, window_bounds = array<i64: 4, 256>}, {transform_indices = @transform_8, window_bounds = array<i64: 1, 8, 256>}]} {
    %c0 = arith.constant 0 : index
    %c0_0 = arith.constant 0 : index
    %0 = vector.load %arg8[%c0, %c0_0] : memref<4x256xf32, #tpu.memory_space<vmem>>, vector<1x128xf32>
    %c1 = arith.constant 1 : index
    %c0_1 = arith.constant 0 : index
    %1 = vector.load %arg8[%c1, %c0_1] : memref<4x256xf32, #tpu.memory_space<vmem>>, vector<1x64xf32>
    %c2 = arith.constant 2 : index
    %c0_2 = arith.constant 0 : index
    %2 = vector.load %arg8[%c2, %c0_2] : memref<4x256xf32, #tpu.memory_space<vmem>>, vector<1x256xf32>
    %c0_3 = arith.constant 0 : index
    %c0_4 = arith.constant 0 : index
    %c0_5 = arith.constant 0 : index
    %c0_6 = arith.constant 0 : index
    %3 = vector.load %arg1[%c0_3, %c0_4, %c0_5, %c0_6] : memref<1x2x8x256xf32, #tpu.memory_space<vmem>>, vector<1x1x8x256xf32>
    %4 = vector.shape_cast %3 : vector<1x1x8x256xf32> to vector<8x256xf32>
    %c0_7 = arith.constant 0 : index
    %c1_8 = arith.constant 1 : index
    %c0_9 = arith.constant 0 : index
    %c0_10 = arith.constant 0 : index
    %5 = vector.load %arg1[%c0_7, %c1_8, %c0_9, %c0_10] : memref<1x2x8x256xf32, #tpu.memory_space<vmem>>, vector<1x1x8x256xf32>
    %6 = vector.shape_cast %5 : vector<1x1x8x256xf32> to vector<8x256xf32>
    %c0_11 = arith.constant 0 : index
    %c0_12 = arith.constant 0 : index
    %7 = vector.load %arg2[%c0_11, %c0_12] : memref<256x128xf32, #tpu.memory_space<vmem>>, vector<256x128xf32>
    %cst = arith.constant dense<0.000000e+00> : vector<8x128xf32>
    %8 = tpu.matmul %4, %7, %cst {dimension_numbers = #tpu.dot_dimension_numbers<[1], [0], [0], [1], [0, 0, 1, 1], [], []>} : vector<8x256xf32>, vector<256x128xf32>, vector<8x128xf32> -> vector<8x128xf32>
    %9 = vector.broadcast %0 : vector<1x128xf32> to vector<8x128xf32>
    %10 = arith.addf %8, %9 : vector<8x128xf32>
    %c0_13 = arith.constant 0 : index
    %c0_14 = arith.constant 0 : index
    %11 = vector.load %arg2[%c0_13, %c0_14] : memref<256x128xf32, #tpu.memory_space<vmem>>, vector<256x128xf32>
    %cst_15 = arith.constant dense<0.000000e+00> : vector<8x128xf32>
    %12 = tpu.matmul %6, %11, %cst_15 {dimension_numbers = #tpu.dot_dimension_numbers<[1], [0], [0], [1], [0, 0, 1, 1], [], []>} : vector<8x256xf32>, vector<256x128xf32>, vector<8x128xf32> -> vector<8x128xf32>
    %13 = vector.broadcast %0 : vector<1x128xf32> to vector<8x128xf32>
    %14 = arith.addf %12, %13 : vector<8x128xf32>
    %cst_16 = arith.constant 0.000000e+00 : f32
    %15 = vector.broadcast %cst_16 : f32 to vector<9x128xf32>
    %c0_17 = arith.constant 0 : index
    %c0_18 = arith.constant 0 : index
    %16 = vector.load %arg10[%c0_17, %c0_18] : memref<9x128xf32, #tpu.memory_space<vmem>>, vector<9x128xf32>
    tpu.vector_store %arg10[%c0_17, %c0_18], %15 {strides = array<i32>} : memref<9x128xf32, #tpu.memory_space<vmem>>, vector<9x128xf32>,
    %c1_19 = arith.constant 1 : index
    %c0_20 = arith.constant 0 : index
    %17 = vector.load %arg10[%c1_19, %c0_20] : memref<9x128xf32, #tpu.memory_space<vmem>>, vector<8x128xf32>
    tpu.vector_store %arg10[%c1_19, %c0_20], %14 {strides = array<i32>} : memref<9x128xf32, #tpu.memory_space<vmem>>, vector<8x128xf32>,
    %c0_21 = arith.constant 0 : index
    %c0_22 = arith.constant 0 : index
    %18 = vector.load %arg10[%c0_21, %c0_22] : memref<9x128xf32, #tpu.memory_space<vmem>>, vector<8x128xf32>
    %c0_23 = arith.constant 0 : index
    %c0_24 = arith.constant 0 : index
    %19 = vector.load %arg3[%c0_23, %c0_24] : memref<128x64xf32, #tpu.memory_space<vmem>>, vector<128x64xf32>
    %cst_25 = arith.constant dense<0.000000e+00> : vector<8x64xf32>
    %20 = tpu.matmul %18, %19, %cst_25 {dimension_numbers = #tpu.dot_dimension_numbers<[1], [0], [0], [1], [0, 0, 1, 1], [], []>} : vector<8x128xf32>, vector<128x64xf32>, vector<8x64xf32> -> vector<8x64xf32>
    %c0_26 = arith.constant 0 : index
    %c0_27 = arith.constant 0 : index
    %21 = vector.load %arg4[%c0_26, %c0_27] : memref<128x64xf32, #tpu.memory_space<vmem>>, vector<128x64xf32>
    %cst_28 = arith.constant dense<0.000000e+00> : vector<8x64xf32>
    %22 = tpu.matmul %10, %21, %cst_28 {dimension_numbers = #tpu.dot_dimension_numbers<[1], [0], [0], [1], [0, 0, 1, 1], [], []>} : vector<8x128xf32>, vector<128x64xf32>, vector<8x64xf32> -> vector<8x64xf32>
    %23 = arith.addf %20, %22 : vector<8x64xf32>
    %c1_29 = arith.constant 1 : index
    %c0_30 = arith.constant 0 : index
    %24 = vector.load %arg10[%c1_29, %c0_30] : memref<9x128xf32, #tpu.memory_space<vmem>>, vector<8x128xf32>
    %c0_31 = arith.constant 0 : index
    %c0_32 = arith.constant 0 : index
    %25 = vector.load %arg5[%c0_31, %c0_32] : memref<128x64xf32, #tpu.memory_space<vmem>>, vector<128x64xf32>
    %cst_33 = arith.constant dense<0.000000e+00> : vector<8x64xf32>
    %26 = tpu.matmul %24, %25, %cst_33 {dimension_numbers = #tpu.dot_dimension_numbers<[1], [0], [0], [1], [0, 0, 1, 1], [], []>} : vector<8x128xf32>, vector<128x64xf32>, vector<8x64xf32> -> vector<8x64xf32>
    %27 = arith.addf %23, %26 : vector<8x64xf32>
    %28 = vector.broadcast %1 : vector<1x64xf32> to vector<8x64xf32>
    %29 = arith.addf %27, %28 : vector<8x64xf32>
    %c0_34 = arith.constant 0 : index
    %c0_35 = arith.constant 0 : index
    %30 = vector.load %arg6[%c0_34, %c0_35] : memref<64x256xf32, #tpu.memory_space<vmem>>, vector<64x256xf32>
    %cst_36 = arith.constant dense<0.000000e+00> : vector<8x256xf32>
    %31 = tpu.matmul %29, %30, %cst_36 {dimension_numbers = #tpu.dot_dimension_numbers<[1], [0], [0], [1], [0, 0, 1, 1], [], []>} : vector<8x64xf32>, vector<64x256xf32>, vector<8x256xf32> -> vector<8x256xf32>
    %32 = vector.broadcast %2 : vector<1x256xf32> to vector<8x256xf32>
    %33 = arith.addf %31, %32 : vector<8x256xf32>
    %cst_37 = arith.constant 0.000000e+00 : f32
    %34 = vector.broadcast %cst_37 : f32 to vector<8x256xf32>
    %35 = arith.maximumf %33, %34 : vector<8x256xf32>
    %c3 = arith.constant 3 : index
    %c0_38 = arith.constant 0 : index
    %36 = vector.load %arg8[%c3, %c0_38] : memref<4x256xf32, #tpu.memory_space<vmem>>, vector<1x256xf32>
    %c0_39 = arith.constant 0 : index
    %c0_40 = arith.constant 0 : index
    %37 = vector.load %arg7[%c0_39, %c0_40] : memref<256x256xf32, #tpu.memory_space<vmem>>, vector<256x256xf32>
    %cst_41 = arith.constant dense<0.000000e+00> : vector<8x256xf32>
    %38 = tpu.matmul %4, %37, %cst_41 {dimension_numbers = #tpu.dot_dimension_numbers<[1], [0], [0], [1], [0, 0, 1, 1], [], []>} : vector<8x256xf32>, vector<256x256xf32>, vector<8x256xf32> -> vector<8x256xf32>
    %39 = vector.broadcast %36 : vector<1x256xf32> to vector<8x256xf32>
    %40 = arith.addf %38, %39 : vector<8x256xf32>
    %41 = arith.addf %35, %40 : vector<8x256xf32>
    %c0_42 = arith.constant 0 : index
    %c0_43 = arith.constant 0 : index
    %c0_44 = arith.constant 0 : index
    %42 = vector.load %arg9[%c0_42, %c0_43, %c0_44] : memref<1x8x256xf32, #tpu.memory_space<vmem>>, vector<1x8x256xf32>
    %43 = vector.shape_cast %42 : vector<1x8x256xf32> to vector<8x256xf32>
    %44 = vector.shape_cast %41 : vector<8x256xf32> to vector<1x8x256xf32>
    tpu.vector_store %arg9[%c0_42, %c0_43, %c0_44], %44 {strides = array<i32>} : memref<1x8x256xf32, #tpu.memory_space<vmem>>, vector<1x8x256xf32>,
    return
  }
  func.func @transform_0(%arg0: i32) -> (i32, i32, i32, i32) {
    %c0_i32 = arith.constant 0 : i32
    %c0_i32_0 = arith.constant 0 : i32
    %c0_i32_1 = arith.constant 0 : i32
    %c0_i32_2 = arith.constant 0 : i32
    return %arg0, %c0_i32, %c0_i32_0, %c0_i32_1 : i32, i32, i32, i32
  }
  func.func @transform_1(%arg0: i32) -> (i32, i32) {
    %c0_i32 = arith.constant 0 : i32
    %c0_i32_0 = arith.constant 0 : i32
    %c0_i32_1 = arith.constant 0 : i32
    return %c0_i32, %c0_i32_0 : i32, i32
  }
  func.func @transform_2(%arg0: i32) -> (i32, i32) {
    %c0_i32 = arith.constant 0 : i32
    %c0_i32_0 = arith.constant 0 : i32
    %c0_i32_1 = arith.constant 0 : i32
    return %c0_i32, %c0_i32_0 : i32, i32
  }
  func.func @transform_3(%arg0: i32) -> (i32, i32) {
    %c0_i32 = arith.constant 0 : i32
    %c0_i32_0 = arith.constant 0 : i32
    %c0_i32_1 = arith.constant 0 : i32
    return %c0_i32, %c0_i32_0 : i32, i32
  }
  func.func @transform_4(%arg0: i32) -> (i32, i32) {
    %c0_i32 = arith.constant 0 : i32
    %c0_i32_0 = arith.constant 0 : i32
    %c0_i32_1 = arith.constant 0 : i32
    return %c0_i32, %c0_i32_0 : i32, i32
  }
  func.func @transform_5(%arg0: i32) -> (i32, i32) {
    %c0_i32 = arith.constant 0 : i32
    %c0_i32_0 = arith.constant 0 : i32
    %c0_i32_1 = arith.constant 0 : i32
    return %c0_i32, %c0_i32_0 : i32, i32
  }
  func.func @transform_6(%arg0: i32) -> (i32, i32) {
    %c0_i32 = arith.constant 0 : i32
    %c0_i32_0 = arith.constant 0 : i32
    %c0_i32_1 = arith.constant 0 : i32
    return %c0_i32, %c0_i32_0 : i32, i32
  }
  func.func @transform_7(%arg0: i32) -> (i32, i32) {
    %c0_i32 = arith.constant 0 : i32
    %c0_i32_0 = arith.constant 0 : i32
    %c0_i32_1 = arith.constant 0 : i32
    return %c0_i32, %c0_i32_0 : i32, i32
  }
  func.func @transform_8(%arg0: i32) -> (i32, i32, i32) {
    %c0_i32 = arith.constant 0 : i32
    %c0_i32_0 = arith.constant 0 : i32
    %c0_i32_1 = arith.constant 0 : i32
    return %arg0, %c0_i32, %c0_i32_0 : i32, i32, i32
  }
}

module attributes {stable_mosaic.version = 11 : i64} {
  func.func @kernel(%arg0: i32, %arg1: memref<1x8x256xf32, #tpu.memory_space<vmem>>, %arg2: memref<256x64xf32, #tpu.memory_space<vmem>>, %arg3: memref<64x64xf32, #tpu.memory_space<vmem>>, %arg4: memref<64x64xf32, #tpu.memory_space<vmem>>, %arg5: memref<64x64xf32, #tpu.memory_space<vmem>>, %arg6: memref<64x256xf32, #tpu.memory_space<vmem>>, %arg7: memref<4x256xf32, #tpu.memory_space<vmem>>, %arg8: memref<1x8x256xf32, #tpu.memory_space<vmem>>, %arg9: memref<10x64xf32, #tpu.memory_space<vmem>>) attributes {dimension_semantics = [#tpu.dimension_semantics<parallel>], iteration_bounds = array<i64: 2>, scalar_prefetch = 0 : i64, scratch_operands = 1 : i64, tpu.core_type = #tpu.core_type<tc>, window_params = [{transform_indices = @transform_0, window_bounds = array<i64: 1, 8, 256>}, {pipeline_mode = #tpu.pipeline_mode<synchronous>, transform_indices = @transform_1, window_bounds = array<i64: 256, 64>}, {pipeline_mode = #tpu.pipeline_mode<synchronous>, transform_indices = @transform_2, window_bounds = array<i64: 64, 64>}, {pipeline_mode = #tpu.pipeline_mode<synchronous>, transform_indices = @transform_3, window_bounds = array<i64: 64, 64>}, {pipeline_mode = #tpu.pipeline_mode<synchronous>, transform_indices = @transform_4, window_bounds = array<i64: 64, 64>}, {pipeline_mode = #tpu.pipeline_mode<synchronous>, transform_indices = @transform_5, window_bounds = array<i64: 64, 256>}, {pipeline_mode = #tpu.pipeline_mode<synchronous>, transform_indices = @transform_6, window_bounds = array<i64: 4, 256>}, {transform_indices = @transform_7, window_bounds = array<i64: 1, 8, 256>}]} {
    %c0 = arith.constant 0 : index
    %c0_0 = arith.constant 0 : index
    %0 = vector.load %arg7[%c0, %c0_0] : memref<4x256xf32, #tpu.memory_space<vmem>>, vector<1x64xf32>
    %c1 = arith.constant 1 : index
    %c0_1 = arith.constant 0 : index
    %1 = vector.load %arg7[%c1, %c0_1] : memref<4x256xf32, #tpu.memory_space<vmem>>, vector<1x64xf32>
    %c2 = arith.constant 2 : index
    %c0_2 = arith.constant 0 : index
    %2 = vector.load %arg7[%c2, %c0_2] : memref<4x256xf32, #tpu.memory_space<vmem>>, vector<1x256xf32>
    %c0_3 = arith.constant 0 : index
    %c0_4 = arith.constant 0 : index
    %c0_5 = arith.constant 0 : index
    %3 = vector.load %arg1[%c0_3, %c0_4, %c0_5] : memref<1x8x256xf32, #tpu.memory_space<vmem>>, vector<1x8x256xf32>
    %4 = vector.shape_cast %3 : vector<1x8x256xf32> to vector<8x256xf32>
    %c0_6 = arith.constant 0 : index
    %c0_7 = arith.constant 0 : index
    %5 = vector.load %arg2[%c0_6, %c0_7] : memref<256x64xf32, #tpu.memory_space<vmem>>, vector<256x64xf32>
    %cst = arith.constant dense<0.000000e+00> : vector<8x64xf32>
    %6 = tpu.matmul %4, %5, %cst {dimension_numbers = #tpu.dot_dimension_numbers<[1], [0], [0], [1], [0, 0, 1, 1], [], []>} : vector<8x256xf32>, vector<256x64xf32>, vector<8x64xf32> -> vector<8x64xf32>
    %7 = vector.broadcast %0 : vector<1x64xf32> to vector<8x64xf32>
    %8 = arith.addf %6, %7 : vector<8x64xf32>
    %cst_8 = arith.constant 0.000000e+00 : f32
    %9 = vector.broadcast %cst_8 : f32 to vector<10x64xf32>
    %c0_9 = arith.constant 0 : index
    %c0_10 = arith.constant 0 : index
    %10 = vector.load %arg9[%c0_9, %c0_10] : memref<10x64xf32, #tpu.memory_space<vmem>>, vector<10x64xf32>
    tpu.vector_store %arg9[%c0_9, %c0_10], %9 {strides = array<i32>} : memref<10x64xf32, #tpu.memory_space<vmem>>, vector<10x64xf32>,
    %c1_11 = arith.constant 1 : index
    %c0_12 = arith.constant 0 : index
    %11 = vector.load %arg9[%c1_11, %c0_12] : memref<10x64xf32, #tpu.memory_space<vmem>>, vector<8x64xf32>
    tpu.vector_store %arg9[%c1_11, %c0_12], %8 {strides = array<i32>} : memref<10x64xf32, #tpu.memory_space<vmem>>, vector<8x64xf32>,
    %c0_13 = arith.constant 0 : index
    %c0_14 = arith.constant 0 : index
    %12 = vector.load %arg9[%c0_13, %c0_14] : memref<10x64xf32, #tpu.memory_space<vmem>>, vector<8x64xf32>
    %c0_15 = arith.constant 0 : index
    %c0_16 = arith.constant 0 : index
    %13 = vector.load %arg3[%c0_15, %c0_16] : memref<64x64xf32, #tpu.memory_space<vmem>>, vector<64x64xf32>
    %cst_17 = arith.constant dense<0.000000e+00> : vector<8x64xf32>
    %14 = tpu.matmul %12, %13, %cst_17 {dimension_numbers = #tpu.dot_dimension_numbers<[1], [0], [0], [1], [0, 0, 1, 1], [], []>} : vector<8x64xf32>, vector<64x64xf32>, vector<8x64xf32> -> vector<8x64xf32>
    %c1_18 = arith.constant 1 : index
    %c0_19 = arith.constant 0 : index
    %15 = vector.load %arg9[%c1_18, %c0_19] : memref<10x64xf32, #tpu.memory_space<vmem>>, vector<8x64xf32>
    %c0_20 = arith.constant 0 : index
    %c0_21 = arith.constant 0 : index
    %16 = vector.load %arg4[%c0_20, %c0_21] : memref<64x64xf32, #tpu.memory_space<vmem>>, vector<64x64xf32>
    %cst_22 = arith.constant dense<0.000000e+00> : vector<8x64xf32>
    %17 = tpu.matmul %15, %16, %cst_22 {dimension_numbers = #tpu.dot_dimension_numbers<[1], [0], [0], [1], [0, 0, 1, 1], [], []>} : vector<8x64xf32>, vector<64x64xf32>, vector<8x64xf32> -> vector<8x64xf32>
    %18 = arith.addf %14, %17 : vector<8x64xf32>
    %c2_23 = arith.constant 2 : index
    %c0_24 = arith.constant 0 : index
    %19 = vector.load %arg9[%c2_23, %c0_24] : memref<10x64xf32, #tpu.memory_space<vmem>>, vector<8x64xf32>
    %c0_25 = arith.constant 0 : index
    %c0_26 = arith.constant 0 : index
    %20 = vector.load %arg5[%c0_25, %c0_26] : memref<64x64xf32, #tpu.memory_space<vmem>>, vector<64x64xf32>
    %cst_27 = arith.constant dense<0.000000e+00> : vector<8x64xf32>
    %21 = tpu.matmul %19, %20, %cst_27 {dimension_numbers = #tpu.dot_dimension_numbers<[1], [0], [0], [1], [0, 0, 1, 1], [], []>} : vector<8x64xf32>, vector<64x64xf32>, vector<8x64xf32> -> vector<8x64xf32>
    %22 = arith.addf %18, %21 : vector<8x64xf32>
    %23 = vector.broadcast %1 : vector<1x64xf32> to vector<8x64xf32>
    %24 = arith.addf %22, %23 : vector<8x64xf32>
    %c0_28 = arith.constant 0 : index
    %c0_29 = arith.constant 0 : index
    %25 = vector.load %arg6[%c0_28, %c0_29] : memref<64x256xf32, #tpu.memory_space<vmem>>, vector<64x256xf32>
    %cst_30 = arith.constant dense<0.000000e+00> : vector<8x256xf32>
    %26 = tpu.matmul %24, %25, %cst_30 {dimension_numbers = #tpu.dot_dimension_numbers<[1], [0], [0], [1], [0, 0, 1, 1], [], []>} : vector<8x64xf32>, vector<64x256xf32>, vector<8x256xf32> -> vector<8x256xf32>
    %27 = vector.broadcast %2 : vector<1x256xf32> to vector<8x256xf32>
    %28 = arith.addf %26, %27 : vector<8x256xf32>
    %cst_31 = arith.constant 0.000000e+00 : f32
    %29 = vector.broadcast %cst_31 : f32 to vector<8x256xf32>
    %30 = arith.maximumf %28, %29 : vector<8x256xf32>
    %31 = arith.addf %30, %4 : vector<8x256xf32>
    %c0_32 = arith.constant 0 : index
    %c0_33 = arith.constant 0 : index
    %c0_34 = arith.constant 0 : index
    %32 = vector.load %arg8[%c0_32, %c0_33, %c0_34] : memref<1x8x256xf32, #tpu.memory_space<vmem>>, vector<1x8x256xf32>
    %33 = vector.shape_cast %32 : vector<1x8x256xf32> to vector<8x256xf32>
    %34 = vector.shape_cast %31 : vector<8x256xf32> to vector<1x8x256xf32>
    tpu.vector_store %arg8[%c0_32, %c0_33, %c0_34], %34 {strides = array<i32>} : memref<1x8x256xf32, #tpu.memory_space<vmem>>, vector<1x8x256xf32>,
    return
  }
  func.func @transform_0(%arg0: i32) -> (i32, i32, i32) {
    %c0_i32 = arith.constant 0 : i32
    %c0_i32_0 = arith.constant 0 : i32
    %c0_i32_1 = arith.constant 0 : i32
    return %arg0, %c0_i32, %c0_i32_0 : i32, i32, i32
  }
  func.func @transform_1(%arg0: i32) -> (i32, i32) {
    %c0_i32 = arith.constant 0 : i32
    %c0_i32_0 = arith.constant 0 : i32
    %c0_i32_1 = arith.constant 0 : i32
    return %c0_i32, %c0_i32_0 : i32, i32
  }
  func.func @transform_2(%arg0: i32) -> (i32, i32) {
    %c0_i32 = arith.constant 0 : i32
    %c0_i32_0 = arith.constant 0 : i32
    %c0_i32_1 = arith.constant 0 : i32
    return %c0_i32, %c0_i32_0 : i32, i32
  }
  func.func @transform_3(%arg0: i32) -> (i32, i32) {
    %c0_i32 = arith.constant 0 : i32
    %c0_i32_0 = arith.constant 0 : i32
    %c0_i32_1 = arith.constant 0 : i32
    return %c0_i32, %c0_i32_0 : i32, i32
  }
  func.func @transform_4(%arg0: i32) -> (i32, i32) {
    %c0_i32 = arith.constant 0 : i32
    %c0_i32_0 = arith.constant 0 : i32
    %c0_i32_1 = arith.constant 0 : i32
    return %c0_i32, %c0_i32_0 : i32, i32
  }
  func.func @transform_5(%arg0: i32) -> (i32, i32) {
    %c0_i32 = arith.constant 0 : i32
    %c0_i32_0 = arith.constant 0 : i32
    %c0_i32_1 = arith.constant 0 : i32
    return %c0_i32, %c0_i32_0 : i32, i32
  }
  func.func @transform_6(%arg0: i32) -> (i32, i32) {
    %c0_i32 = arith.constant 0 : i32
    %c0_i32_0 = arith.constant 0 : i32
    %c0_i32_1 = arith.constant 0 : i32
    return %c0_i32, %c0_i32_0 : i32, i32
  }
  func.func @transform_7(%arg0: i32) -> (i32, i32, i32) {
    %c0_i32 = arith.constant 0 : i32
    %c0_i32_0 = arith.constant 0 : i32
    %c0_i32_1 = arith.constant 0 : i32
    return %arg0, %c0_i32, %c0_i32_0 : i32, i32, i32
  }
}

</mosaic_0001>

<llo_original>
// kernel: _lambda_.3
$region0: #{_lambda_.3}
  #allocation0 [shape = 'u32[]', space=smem, size = 0x4, offset = 0x4, fixed_abs, tag = 'smem constant byte address 0x4 - core index']
  #allocation1 [shape = 'u32[144,128]{1,0:T(1,128)}', space=vmem, size = 0x12000, scoped, tag = 'internal scratch']
  #allocation2 [shape = 'f32[10,64]{1,0:T(8,128)}', space=vmem, size = 0x2000, scoped, tag = 'scratch operand']
  %s0 = inlined_call_operand.vmem [shape: f32[2,8,256], index: 0, kind: input, shape index: {}]
  %s1 = inlined_call_operand.vmem [shape: f32[256,64], index: 1, kind: input, shape index: {}]
  %s2 = inlined_call_operand.vmem [shape: f32[64,64], index: 2, kind: input, shape index: {}]
  %s3 = inlined_call_operand.vmem [shape: f32[64,64], index: 3, kind: input, shape index: {}]
  %s4 = inlined_call_operand.vmem [shape: f32[64,64], index: 4, kind: input, shape index: {}]
  %s5 = inlined_call_operand.vmem [shape: f32[64,256], index: 5, kind: input, shape index: {}]
  %s6 = inlined_call_operand.vmem [shape: f32[4,256], index: 6, kind: input, shape index: {}]
  %s7 = inlined_call_operand.vmem [shape: f32[2,8,256], index: 7, kind: output, shape index: {}]
  %s8 = sld [smem:[#allocation0]]
  $region61: #{_lambda_.3} parent=0
    _
  %s10 = ssub.s32 1, %s8
  %s11 = scalar_select 0, %s10, %s8
  loop: start=0, step=1, limit=4
  $region2: #{_lambda_.3} parent=0 // loop_pre_header
    _
  $region3: #{_lambda_.3} parent=0 // loop_header
    %s13 = sphi 0, %s17
    %p14 = scmp.ge.s32.totalorder %s13, 4
    %s23 = sphi 0, %s25
    %s26 = sphi 0, %s23
    %s27 = sphi 0, %s26
    %s43 = sphi 0, %s27
    %s47 = sphi 0, %s47
    %s49 = sphi 0, %s47
    %s50 = sphi 0, %s49
    %s64 = sphi 0, %s50
    %s68 = sphi 0, %s68
    %s70 = sphi 0, %s68
    %s71 = sphi 0, %s70
    %s85 = sphi 0, %s71
    %s89 = sphi 0, %s89
    %s91 = sphi 0, %s89
    %s92 = sphi 0, %s91
    %s106 = sphi 0, %s92
    %s110 = sphi 0, %s110
    %s112 = sphi 0, %s110
    %s113 = sphi 0, %s112
    %s127 = sphi 0, %s113
    %s131 = sphi 0, %s131
    %s133 = sphi 0, %s131
    %s134 = sphi 0, %s133
    %s148 = sphi 0, %s134
    %s152 = sphi 0, %s152
    %s154 = sphi 0, %s152
    %s155 = sphi 0, %s154
    %s169 = sphi 0, %s155
    %s175 = sphi 0, %s177
    %s178 = sphi 0, %s175
    %s179 = sphi 0, %s178
    %s195 = sphi 0, %s179
  $region4: #{_lambda_.3} parent=0 // loop_header_branch
    %16 = sbr.rel (%p14) target = $region8
  $region5: #{_lambda_.3} parent=0 // loop_body
    %s18 = ssub.s32 %s13, 1
    %s19 = ssub.s32 %s13, 2
    %s20 = sadd.s32 %s13, 1
    %s21 = ssub.s32 %s13, %s20
    %p22 = scmp.eq.s32.totalorder %s21, 0
    %s24 = sadd.s32 %s23, 1
    %s25 = scalar_select %p22, %s23, %s24
    %p28 = pneg %p22
    %p29 = scmp.eq.s32.totalorder %s13, 1
    %p30 = por %p28, %p29
    %p31 = scmp.ne.s32.totalorder %s23, %s26
    %p32 = scmp.eq.s32.totalorder %s13, 0
    %p33 = por %p31, %p32
    %p34 = scmp.ne.s32.totalorder %s23, %s26
    %p35 = scmp.eq.s32.totalorder %s18, 1
    %p36 = por %p34, %p35
    %p37 = scmp.ne.s32.totalorder %s26, %s27
    %p38 = scmp.eq.s32.totalorder %s18, 0
    %p39 = por %p37, %p38
    %p40 = scmp.ne.s32.totalorder %s26, %s27
    %p41 = scmp.eq.s32.totalorder %s19, 1
    %p42 = por %p40, %p41
    %p44 = scmp.ne.s32.totalorder %s27, %s43
    %p45 = scmp.eq.s32.totalorder %s19, 0
    %p46 = por %p44, %p45
    %s48 = sadd.s32 %s47, 1
    %p51 = scmp.eq.s32.totalorder %s13, 1
    %p52 = scmp.ne.s32.totalorder %s47, %s49
    %p53 = scmp.eq.s32.totalorder %s13, 0
    %p54 = por %p52, %p53
    %p55 = scmp.ne.s32.totalorder %s47, %s49
    %p56 = scmp.eq.s32.totalorder %s18, 1
    %p57 = por %p55, %p56
    %p58 = scmp.ne.s32.totalorder %s49, %s50
    %p59 = scmp.eq.s32.totalorder %s18, 0
    %p60 = por %p58, %p59
    %p61 = scmp.ne.s32.totalorder %s49, %s50
    %p62 = scmp.eq.s32.totalorder %s19, 1
    %p63 = por %p61, %p62
    %p65 = scmp.ne.s32.totalorder %s50, %s64
    %p66 = scmp.eq.s32.totalorder %s19, 0
    %p67 = por %p65, %p66
    %s69 = sadd.s32 %s68, 1
    %p72 = scmp.eq.s32.totalorder %s13, 1
    %p73 = scmp.ne.s32.totalorder %s68, %s70
    %p74 = scmp.eq.s32.totalorder %s13, 0
    %p75 = por %p73, %p74
    %p76 = scmp.ne.s32.totalorder %s68, %s70
    %p77 = scmp.eq.s32.totalorder %s18, 1
    %p78 = por %p76, %p77
    %p79 = scmp.ne.s32.totalorder %s70, %s71
    %p80 = scmp.eq.s32.totalorder %s18, 0
    %p81 = por %p79, %p80
    %p82 = scmp.ne.s32.totalorder %s70, %s71
    %p83 = scmp.eq.s32.totalorder %s19, 1
    %p84 = por %p82, %p83
    %p86 = scmp.ne.s32.totalorder %s71, %s85
    %p87 = scmp.eq.s32.totalorder %s19, 0
    %p88 = por %p86, %p87
    %s90 = sadd.s32 %s89, 1
    %p93 = scmp.eq.s32.totalorder %s13, 1
    %p94 = scmp.ne.s32.totalorder %s89, %s91
    %p95 = scmp.eq.s32.totalorder %s13, 0
    %p96 = por %p94, %p95
    %p97 = scmp.ne.s32.totalorder %s89, %s91
    %p98 = scmp.eq.s32.totalorder %s18, 1
    %p99 = por %p97, %p98
    %p100 = scmp.ne.s32.totalorder %s91, %s92
    %p101 = scmp.eq.s32.totalorder %s18, 0
    %p102 = por %p100, %p101
    %p103 = scmp.ne.s32.totalorder %s91, %s92
    %p104 = scmp.eq.s32.totalorder %s19, 1
    %p105 = por %p103, %p104
    %p107 = scmp.ne.s32.totalorder %s92, %s106
    %p108 = scmp.eq.s32.totalorder %s19, 0
    %p109 = por %p107, %p108
    %s111 = sadd.s32 %s110, 1
    %p114 = scmp.eq.s32.totalorder %s13, 1
    %p115 = scmp.ne.s32.totalorder %s110, %s112
    %p116 = scmp.eq.s32.totalorder %s13, 0
    %p117 = por %p115, %p116
    %p118 = scmp.ne.s32.totalorder %s110, %s112
    %p119 = scmp.eq.s32.totalorder %s18, 1
    %p120 = por %p118, %p119
    %p121 = scmp.ne.s32.totalorder %s112, %s113
    %p122 = scmp.eq.s32.totalorder %s18, 0
    %p123 = por %p121, %p122
    %p124 = scmp.ne.s32.totalorder %s112, %s113
    %p125 = scmp.eq.s32.totalorder %s19, 1
    %p126 = por %p124, %p125
    %p128 = scmp.ne.s32.totalorder %s113, %s127
    %p129 = scmp.eq.s32.totalorder %s19, 0
    %p130 = por %p128, %p129
    %s132 = sadd.s32 %s131, 1
    %p135 = scmp.eq.s32.totalorder %s13, 1
    %p136 = scmp.ne.s32.totalorder %s131, %s133
    %p137 = scmp.eq.s32.totalorder %s13, 0
    %p138 = por %p136, %p137
    %p139 = scmp.ne.s32.totalorder %s131, %s133
    %p140 = scmp.eq.s32.totalorder %s18, 1
    %p141 = por %p139, %p140
    %p142 = scmp.ne.s32.totalorder %s133, %s134
    %p143 = scmp.eq.s32.totalorder %s18, 0
    %p144 = por %p142, %p143
    %p145 = scmp.ne.s32.totalorder %s133, %s134
    %p146 = scmp.eq.s32.totalorder %s19, 1
    %p147 = por %p145, %p146
    %p149 = scmp.ne.s32.totalorder %s134, %s148
    %p150 = scmp.eq.s32.totalorder %s19, 0
    %p151 = por %p149, %p150
    %s153 = sadd.s32 %s152, 1
    %p156 = scmp.eq.s32.totalorder %s13, 1
    %p157 = scmp.ne.s32.totalorder %s152, %s154
    %p158 = scmp.eq.s32.totalorder %s13, 0
    %p159 = por %p157, %p158
    %p160 = scmp.ne.s32.totalorder %s152, %s154
    %p161 = scmp.eq.s32.totalorder %s18, 1
    %p162 = por %p160, %p161
    %p163 = scmp.ne.s32.totalorder %s154, %s155
    %p164 = scmp.eq.s32.totalorder %s18, 0
    %p165 = por %p163, %p164
    %p166 = scmp.ne.s32.totalorder %s154, %s155
    %p167 = scmp.eq.s32.totalorder %s19, 1
    %p168 = por %p166, %p167
    %p170 = scmp.ne.s32.totalorder %s155, %s169
    %p171 = scmp.eq.s32.totalorder %s19, 0
    %p172 = por %p170, %p171
    %s173 = ssub.s32 %s13, %s20
    %p174 = scmp.eq.s32.totalorder %s173, 0
    %s176 = sadd.s32 %s175, 1
    %s177 = scalar_select %p174, %s175, %s176
    %p180 = pneg %p174
    %p181 = scmp.eq.s32.totalorder %s13, 1
    %p182 = por %p180, %p181
    %p183 = scmp.ne.s32.totalorder %s175, %s178
    %p184 = scmp.eq.s32.totalorder %s13, 0
    %p185 = por %p183, %p184
    %p186 = scmp.ne.s32.totalorder %s175, %s178
    %p187 = scmp.eq.s32.totalorder %s18, 1
    %p188 = por %p186, %p187
    %p189 = scmp.ne.s32.totalorder %s178, %s179
    %p190 = scmp.eq.s32.totalorder %s18, 0
    %p191 = por %p189, %p190
    %p192 = scmp.ne.s32.totalorder %s178, %s179
    %p193 = scmp.eq.s32.totalorder %s19, 1
    %p194 = por %p192, %p193
    %p196 = scmp.ne.s32.totalorder %s179, %s195
    %p197 = scmp.eq.s32.totalorder %s19, 0
    %p198 = por %p196, %p197
    %p199 = scmp.le.s32.totalorder 1, %s13
    %p200 = scmp.lt.s32.totalorder %s13, 3
    %p201 = pnand %p199, %p200
    %p202 = pneg %p201
    // Predicated region
    $region9: #{_lambda_.3} parent=5 // pred_check
      _
    $region10: #{_lambda_.3} parent=5 // pred_check_branch
      %204 = sbr.rel (%p201) target = $region12
    $region11: #{_lambda_.3} parent=5 // pred_region
      %s205 = ssub.s32 %s13, 1
      // Predicated region
      $region13: #{_lambda_.3} parent=11 // pred_check
        %p206 = pneg %p60
      $region14: #{_lambda_.3} parent=11 // pred_check_branch
        %208 = sbr.rel (%p206) target = $region16
      $region15: #{_lambda_.3} parent=11 // pred_region
        _
      $region16: #{_lambda_.3} parent=11 // pred_fallthru
        _
      // Predicated region
      $region17: #{_lambda_.3} parent=11 // pred_check
        %p209 = pneg %p81
      $region18: #{_lambda_.3} parent=11 // pred_check_branch
        %211 = sbr.rel (%p209) target = $region20
      $region19: #{_lambda_.3} parent=11 // pred_region
        _
      $region20: #{_lambda_.3} parent=11 // pred_fallthru
        _
      // Predicated region
      $region21: #{_lambda_.3} parent=11 // pred_check
        %p212 = pneg %p102
      $region22: #{_lambda_.3} parent=11 // pred_check_branch
        %214 = sbr.rel (%p212) target = $region24
      $region23: #{_lambda_.3} parent=11 // pred_region
        _
      $region24: #{_lambda_.3} parent=11 // pred_fallthru
        _
      // Predicated region
      $region25: #{_lambda_.3} parent=11 // pred_check
        %p215 = pneg %p123
      $region26: #{_lambda_.3} parent=11 // pred_check_branch
        %217 = sbr.rel (%p215) target = $region28
      $region27: #{_lambda_.3} parent=11 // pred_region
        _
      $region28: #{_lambda_.3} parent=11 // pred_fallthru
        _
      // Predicated region
      $region29: #{_lambda_.3} parent=11 // pred_check
        %p218 = pneg %p144
      $region30: #{_lambda_.3} parent=11 // pred_check_branch
        %220 = sbr.rel (%p218) target = $region32
      $region31: #{_lambda_.3} parent=11 // pred_region
        _
      $region32: #{_lambda_.3} parent=11 // pred_fallthru
        _
      // Predicated region
      $region33: #{_lambda_.3} parent=11 // pred_check
        %p221 = pneg %p165
      $region34: #{_lambda_.3} parent=11 // pred_check_branch
        %223 = sbr.rel (%p221) target = $region36
      $region35: #{_lambda_.3} parent=11 // pred_region
        _
      $region36: #{_lambda_.3} parent=11 // pred_fallthru
        _
    $region12: #{_lambda_.3} parent=5 // pred_fallthru
      _
    %p224 = scmp.lt.s32.totalorder %s13, 2
    // Predicated region
    $region37: #{_lambda_.3} parent=5 // pred_check
      %p225 = pneg %p224
    $region38: #{_lambda_.3} parent=5 // pred_check_branch
      %227 = sbr.rel (%p225) target = $region40
    $region39: #{_lambda_.3} parent=5 // pred_region
      // Predicated region
      $region41: #{_lambda_.3} parent=39 // pred_check
        %p228 = pneg %p33
      $region42: #{_lambda_.3} parent=39 // pred_check_branch
        %230 = sbr.rel (%p228) target = $region44
      $region43: #{_lambda_.3} parent=39 // pred_region
        %p231 = scmp.lt.s32.totalorder %s13, 1
        %s232 = scalar_select %p231, %s13, 1
        %s233 = smul.addr %s232, 2
        %s234 = smul.addr %s233, 8
        %s235 = scalar_lea.vmem %s0, %s234
      $region44: #{_lambda_.3} parent=39 // pred_fallthru
        _
    $region40: #{_lambda_.3} parent=5 // pred_fallthru
      _
    %p236 = scmp.le.s32.totalorder 1, %s13
    %p237 = scmp.lt.s32.totalorder %s13, 3
    %p238 = pnand %p236, %p237
    %p239 = pneg %p238
    // Predicated region
    $region45: #{_lambda_.3} parent=5 // pred_check
      _
    $region46: #{_lambda_.3} parent=5 // pred_check_branch
      %241 = sbr.rel (%p238) target = $region48
    $region47: #{_lambda_.3} parent=5 // pred_region
      %s242 = ssub.s32 %s13, 1
      %p243 = scmp.lt.s32.totalorder %s18, 1
      %s244 = scalar_select %p243, %s18, 1
      %s245 = smul.addr %s244, 2
      %s246 = smul.addr %s245, 8
      %s247 = scalar_lea.vmem %s0, %s246
      %p248 = pneg %p39
      %p249 = pneg %p36
      %p250 = pneg %p60
      %p251 = pneg %p57
      %p252 = pneg %p81
      %p253 = pneg %p78
      %p254 = pneg %p102
      %p255 = pneg %p99
      %p256 = pneg %p123
      %p257 = pneg %p120
      %p258 = pneg %p144
      %p259 = pneg %p141
      %p260 = pneg %p165
      %p261 = pneg %p162
      %p262 = pneg %p191
      %p263 = pneg %p188
      %p264 = scmp.lt.s32.totalorder %s18, 1
      %s265 = scalar_select %p264, %s18, 1
      %s266 = smul.addr %s265, 2
      %s267 = smul.addr %s266, 8
      %s268 = scalar_lea.vmem %s7, %s267
      %p269 = scmp.lt.s32.totalorder %s18, 1
      %s270 = scalar_select %p269, %s18, 1
      %s271 = smul.addr %s270, 2
      %s272 = smul.addr %s271, 8
      %s273 = scalar_lea.vmem %s0, %s272
      %p274 = scmp.lt.s32.totalorder %s18, 1
      %s275 = scalar_select %p274, %s18, 1
      %s276 = smul.addr %s275, 2
      %s277 = smul.addr %s276, 8
      %s278 = scalar_lea.vmem %s7, %s277
      %v279 = vld [vmem:[%s6] sm:$0x1]
      %v280 = vld [vmem:[%s6 + $0x1] sm:$0x1]
      %s281 = scalar_lea.vmem %s6, 2
      %v282 = vld [vmem:[%s281] ss:$4 sm:$0x3]
      %v283 = vld [vmem:[%s273] sm:$0xff]
      %v284 = vld [vmem:[%s273 + $0x8] sm:$0xff]
      %v285 = vld [vmem:[%s1] sm:$0xff]
      %v286 = vld [vmem:[%s1 + $0x8] sm:$0xff]
      %v287 = vld [vmem:[%s1 + $0x10] sm:$0xff]
      %v288 = vld [vmem:[%s1 + $0x18] sm:$0xff]
      %v289 = vld [vmem:[%s1 + $0x20] sm:$0xff]
      %v290 = vld [vmem:[%s1 + $0x28] sm:$0xff]
      %v291 = vld [vmem:[%s1 + $0x30] sm:$0xff]
      %v292 = vld [vmem:[%s1 + $0x38] sm:$0xff]
      %v293 = vld [vmem:[%s1 + $0x40] sm:$0xff]
      %v294 = vld [vmem:[%s1 + $0x48] sm:$0xff]
      %v295 = vld [vmem:[%s1 + $0x50] sm:$0xff]
      %v296 = vld [vmem:[%s1 + $0x58] sm:$0xff]
      %v297 = vld [vmem:[%s1 + $0x60] sm:$0xff]
      %v298 = vld [vmem:[%s1 + $0x68] sm:$0xff]
      %v299 = vld [vmem:[%s1 + $0x70] sm:$0xff]
      %v300 = vld [vmem:[%s1 + $0x78] sm:$0xff]
      %v301 = vld [vmem:[%s1 + $0x80] sm:$0xff]
      %v302 = vld [vmem:[%s1 + $0x88] sm:$0xff]
      %v303 = vld [vmem:[%s1 + $0x90] sm:$0xff]
      %v304 = vld [vmem:[%s1 + $0x98] sm:$0xff]
      %v305 = vld [vmem:[%s1 + $0xa0] sm:$0xff]
      %v306 = vld [vmem:[%s1 + $0xa8] sm:$0xff]
      %v307 = vld [vmem:[%s1 + $0xb0] sm:$0xff]
      %v308 = vld [vmem:[%s1 + $0xb8] sm:$0xff]
      %v309 = vld [vmem:[%s1 + $0xc0] sm:$0xff]
      %v310 = vld [vmem:[%s1 + $0xc8] sm:$0xff]
      %v311 = vld [vmem:[%s1 + $0xd0] sm:$0xff]
      %v312 = vld [vmem:[%s1 + $0xd8] sm:$0xff]
      %v313 = vld [vmem:[%s1 + $0xe0] sm:$0xff]
      %v314 = vld [vmem:[%s1 + $0xe8] sm:$0xff]
      %v315 = vld [vmem:[%s1 + $0xf0] sm:$0xff]
      %v316 = vld [vmem:[%s1 + $0xf8] sm:$0xff]
      %v317 = vlaneseq
      %v318 = vshrl.u32 %v317, 7
      %v319 = vsub.s32 0, %v318
      %v320 = vrot.slane %v279, %v319
      %321 = vmatprep.subr.mxu0 0.0
      %322 = vmatpush1.msra.mxu0 %v285
      %323 = vmatprep.subr.mxu0 0.0
      %324 = vmatpush1.msra.mxu0 %v286
      %325 = vmatprep.subr.mxu0 0.0
      %326 = vmatpush1.msra.mxu0 %v287
      %327 = vmatprep.subr.mxu0 0.0
      %328 = vmatpush1.msra.mxu0 %v288
      %329 = vmatprep.subr.mxu0 0.0
      %330 = vmatpush1.msra.mxu0 %v289
      %331 = vmatprep.subr.mxu0 0.0
      %332 = vmatpush1.msra.mxu0 %v290
      %333 = vmatprep.subr.mxu0 0.0
      %334 = vmatpush1.msra.mxu0 %v291
      %335 = vmatprep.subr.mxu0 0.0
      %336 = vmatpush1.msra.mxu0 %v292
      %337 = vmatprep.subr.mxu0 0.0
      %338 = vmatpush1.msra.mxu0 %v293
      %339 = vmatprep.subr.mxu0 0.0
      %340 = vmatpush1.msra.mxu0 %v294
      %341 = vmatprep.subr.mxu0 0.0
      %342 = vmatpush1.msra.mxu0 %v295
      %343 = vmatprep.subr.mxu0 0.0
      %344 = vmatpush1.msra.mxu0 %v296
      %345 = vmatprep.subr.mxu0 0.0
      %346 = vmatpush1.msra.mxu0 %v297
      %347 = vmatprep.subr.mxu0 0.0
      %348 = vmatpush1.msra.mxu0 %v298
      %349 = vmatprep.subr.mxu0 0.0
      %350 = vmatpush1.msra.mxu0 %v299
      %351 = vmatprep.subr.mxu0 0.0
      %352 = vmatpush1.msra.mxu0 %v300
      %353 = vmatprep.subr.mxu0 0.0
      %354 = vmatpush1.msra.mxu0 %v301
      %355 = vmatprep.subr.mxu0 0.0
      %356 = vmatpush1.msra.mxu0 %v302
      %357 = vmatprep.subr.mxu0 0.0
      %358 = vmatpush1.msra.mxu0 %v303
      %359 = vmatprep.subr.mxu0 0.0
      %360 = vmatpush1.msra.mxu0 %v304
      %361 = vmatprep.subr.mxu0 0.0
      %362 = vmatpush1.msra.mxu0 %v305
      %363 = vmatprep.subr.mxu0 0.0
      %364 = vmatpush1.msra.mxu0 %v306
      %365 = vmatprep.subr.mxu0 0.0
      %366 = vmatpush1.msra.mxu0 %v307
      %367 = vmatprep.subr.mxu0 0.0
      %368 = vmatpush1.msra.mxu0 %v308
      %369 = vmatprep.subr.mxu0 0.0
      %370 = vmatpush1.msra.mxu0 %v309
      %371 = vmatprep.subr.mxu0 0.0
      %372 = vmatpush1.msra.mxu0 %v310
      %373 = vmatprep.subr.mxu0 0.0
      %374 = vmatpush1.msra.mxu0 %v311
      %375 = vmatprep.subr.mxu0 0.0
      %376 = vmatpush1.msra.mxu0 %v312
      %377 = vmatprep.subr.mxu0 0.0
      %378 = vmatpush1.msra.mxu0 %v313
      %379 = vmatprep.subr.mxu0 0.0
      %380 = vmatpush1.msra.mxu0 %v314
      %381 = vmatprep.subr.mxu0 0.0
      %382 = vmatpush1.msra.mxu0 %v315
      %383 = vmatprep.subr.mxu0 0.0
      %384 = vmatpush1.msra.mxu0 %v316
      %385 = vmatprep.mubr.f32.mxu0 %v284
      %386 = vmatmul.mubr.f32.gmra.mrb[0].mxu0 %v283
      %v387 = vpop.f32.mrb[0].mxu0
      %v388 = vadd.f32 %v320, %v387
      %v389 = vpop.f32.mrb[0].mxu0
      %390 = vdwg.mxu0
      %vm391 = vcmask 523264
      %392 = vst.msk [vmem:[#allocation2] sm:$0xff] %vm391, 0.0
      %vm393 = vcmask 517120
      %394 = vst.msk [vmem:[#allocation2 + $0x8] sm:$0x3] %vm393, 0.0
      %395 = vst.msk [vmem:[#allocation2 + $0x1] sm:$0xff] %vm391, %v388
      %v396 = vld [vmem:[#allocation2] sm:$0xff]
      %v397 = vld [vmem:[%s2] sm:$0xff]
      %v398 = vld [vmem:[%s2 + $0x8] sm:$0xff]
      %v399 = vld [vmem:[%s2 + $0x10] sm:$0xff]
      %v400 = vld [vmem:[%s2 + $0x18] sm:$0xff]
      %v401 = vld [vmem:[%s2 + $0x20] sm:$0xff]
      %v402 = vld [vmem:[%s2 + $0x28] sm:$0xff]
      %v403 = vld [vmem:[%s2 + $0x30] sm:$0xff]
      %v404 = vld [vmem:[%s2 + $0x38] sm:$0xff]
      %v405 = vld [vmem:[#allocation2 + $0x1] sm:$0xff]
      %v406 = vld [vmem:[%s3] sm:$0xff]
      %v407 = vld [vmem:[%s3 + $0x8] sm:$0xff]
      %v408 = vld [vmem:[%s3 + $0x10] sm:$0xff]
      %v409 = vld [vmem:[%s3 + $0x18] sm:$0xff]
      %v410 = vld [vmem:[%s3 + $0x20] sm:$0xff]
      %v411 = vld [vmem:[%s3 + $0x28] sm:$0xff]
      %v412 = vld [vmem:[%s3 + $0x30] sm:$0xff]
      %v413 = vld [vmem:[%s3 + $0x38] sm:$0xff]
      %v415 = vsel %vm391, %v405, 0
      %417 = vmatprep.subr.mxu0 0.0
      %418 = vmatpush1.msra.mxu0 %v406
      %419 = vmatprep.subr.mxu0 0.0
      %420 = vmatpush1.msra.mxu0 %v407
      %421 = vmatprep.subr.mxu0 0.0
      %422 = vmatpush1.msra.mxu0 %v408
      %423 = vmatprep.subr.mxu0 0.0
      %424 = vmatpush1.msra.mxu0 %v409
      %425 = vmatprep.subr.mxu0 0.0
      %426 = vmatpush1.msra.mxu0 %v410
      %427 = vmatprep.subr.mxu0 0.0
      %428 = vmatpush1.msra.mxu0 %v411
      %429 = vmatprep.subr.mxu0 0.0
      %430 = vmatpush1.msra.mxu0 %v412
      %431 = vmatprep.subr.mxu0 0.0
      %432 = vmatpush1.msra.mxu0 %v413
      %433 = vmatprep.subr.mxu0 0.0
      %434 = vmatpush1.msra.mxu0 0.0
      %435 = vmatprep.subr.mxu0 0.0
      %436 = vmatpush1.msra.mxu0 0.0
      %437 = vmatprep.subr.mxu0 0.0
      %438 = vmatpush1.msra.mxu0 0.0
      %439 = vmatprep.subr.mxu0 0.0
      %440 = vmatpush1.msra.mxu0 0.0
      %441 = vmatprep.subr.mxu0 0.0
      %442 = vmatpush1.msra.mxu0 0.0
      %443 = vmatprep.subr.mxu0 0.0
      %444 = vmatpush1.msra.mxu0 0.0
      %445 = vmatprep.subr.mxu0 0.0
      %446 = vmatpush1.msra.mxu0 0.0
      %447 = vmatprep.subr.mxu0 0.0
      %448 = vmatpush1.msra.mxu0 0.0
      %449 = vmatprep.subr.mxu0 0.0
      %450 = vmatpush1.msra.mxu0 0.0
      %451 = vmatprep.subr.mxu0 0.0
      %452 = vmatpush1.msra.mxu0 0.0
      %453 = vmatprep.subr.mxu0 0.0
      %454 = vmatpush1.msra.mxu0 0.0
      %455 = vmatprep.subr.mxu0 0.0
      %456 = vmatpush1.msra.mxu0 0.0
      %457 = vmatprep.subr.mxu0 0.0
      %458 = vmatpush1.msra.mxu0 0.0
      %459 = vmatprep.subr.mxu0 0.0
      %460 = vmatpush1.msra.mxu0 0.0
      %461 = vmatprep.subr.mxu0 0.0
      %462 = vmatpush1.msra.mxu0 0.0
      %463 = vmatprep.subr.mxu0 0.0
      %464 = vmatpush1.msra.mxu0 0.0
      %465 = vmatprep.subr.mxu0 0.0
      %466 = vmatpush1.msra.mxu0 0.0
      %467 = vmatprep.subr.mxu0 0.0
      %468 = vmatpush1.msra.mxu0 0.0
      %469 = vmatprep.subr.mxu0 0.0
      %470 = vmatpush1.msra.mxu0 0.0
      %471 = vmatprep.subr.mxu0 0.0
      %472 = vmatpush1.msra.mxu0 0.0
      %473 = vmatprep.subr.mxu0 0.0
      %474 = vmatpush1.msra.mxu0 0.0
      %475 = vmatprep.subr.mxu0 0.0
      %476 = vmatpush1.msra.mxu0 0.0
      %477 = vmatprep.subr.mxu0 0.0
      %478 = vmatpush1.msra.mxu0 0.0
      %479 = vmatprep.subr.mxu0 0.0
      %480 = vmatpush1.msra.mxu0 0.0
      %481 = vmatprep.mubr.f32.mxu0 0.0
      %482 = vmatmul.mubr.f32.gmra.mrb[0].mxu0 %v415
      %v483 = vpop.f32.mrb[0].mxu0
      %v484 = vadd.f32 0.0, %v483
      %v485 = vpop.f32.mrb[0].mxu0
      %486 = vdwg.mxu0
      %v488 = vsel %vm391, %v396, 0
      %490 = vmatprep.subr.mxu0 0.0
      %491 = vmatpush1.msra.mxu0 %v397
      %492 = vmatprep.subr.mxu0 0.0
      %493 = vmatpush1.msra.mxu0 %v398
      %494 = vmatprep.subr.mxu0 0.0
      %495 = vmatpush1.msra.mxu0 %v399
      %496 = vmatprep.subr.mxu0 0.0
      %497 = vmatpush1.msra.mxu0 %v400
      %498 = vmatprep.subr.mxu0 0.0
      %499 = vmatpush1.msra.mxu0 %v401
      %500 = vmatprep.subr.mxu0 0.0
      %501 = vmatpush1.msra.mxu0 %v402
      %502 = vmatprep.subr.mxu0 0.0
      %503 = vmatpush1.msra.mxu0 %v403
      %504 = vmatprep.subr.mxu0 0.0
      %505 = vmatpush1.msra.mxu0 %v404
      %506 = vmatprep.subr.mxu0 0.0
      %507 = vmatpush1.msra.mxu0 0.0
      %508 = vmatprep.subr.mxu0 0.0
      %509 = vmatpush1.msra.mxu0 0.0
      %510 = vmatprep.subr.mxu0 0.0
      %511 = vmatpush1.msra.mxu0 0.0
      %512 = vmatprep.subr.mxu0 0.0
      %513 = vmatpush1.msra.mxu0 0.0
      %514 = vmatprep.subr.mxu0 0.0
      %515 = vmatpush1.msra.mxu0 0.0
      %516 = vmatprep.subr.mxu0 0.0
      %517 = vmatpush1.msra.mxu0 0.0
      %518 = vmatprep.subr.mxu0 0.0
      %519 = vmatpush1.msra.mxu0 0.0
      %520 = vmatprep.subr.mxu0 0.0
      %521 = vmatpush1.msra.mxu0 0.0
      %522 = vmatprep.subr.mxu0 0.0
      %523 = vmatpush1.msra.mxu0 0.0
      %524 = vmatprep.subr.mxu0 0.0
      %525 = vmatpush1.msra.mxu0 0.0
      %526 = vmatprep.subr.mxu0 0.0
      %527 = vmatpush1.msra.mxu0 0.0
      %528 = vmatprep.subr.mxu0 0.0
      %529 = vmatpush1.msra.mxu0 0.0
      %530 = vmatprep.subr.mxu0 0.0
      %531 = vmatpush1.msra.mxu0 0.0
      %532 = vmatprep.subr.mxu0 0.0
      %533 = vmatpush1.msra.mxu0 0.0
      %534 = vmatprep.subr.mxu0 0.0
      %535 = vmatpush1.msra.mxu0 0.0
      %536 = vmatprep.subr.mxu0 0.0
      %537 = vmatpush1.msra.mxu0 0.0
      %538 = vmatprep.subr.mxu0 0.0
      %539 = vmatpush1.msra.mxu0 0.0
      %540 = vmatprep.subr.mxu0 0.0
      %541 = vmatpush1.msra.mxu0 0.0
      %542 = vmatprep.subr.mxu0 0.0
      %543 = vmatpush1.msra.mxu0 0.0
      %544 = vmatprep.subr.mxu0 0.0
      %545 = vmatpush1.msra.mxu0 0.0
      %546 = vmatprep.subr.mxu0 0.0
      %547 = vmatpush1.msra.mxu0 0.0
      %548 = vmatprep.subr.mxu0 0.0
      %549 = vmatpush1.msra.mxu0 0.0
      %550 = vmatprep.subr.mxu0 0.0
      %551 = vmatpush1.msra.mxu0 0.0
      %552 = vmatprep.subr.mxu0 0.0
      %553 = vmatpush1.msra.mxu0 0.0
      %554 = vmatprep.mubr.f32.mxu0 0.0
      %555 = vmatmul.mubr.f32.gmra.mrb[0].mxu0 %v488
      %v556 = vpop.f32.mrb[0].mxu0
      %v557 = vadd.f32 %v484, %v556
      %v558 = vpop.f32.mrb[0].mxu0
      %559 = vdwg.mxu0
      %v560 = vld [vmem:[#allocation2 + $0x2] sm:$0xff]
      %v561 = vld [vmem:[%s4] sm:$0xff]
      %v562 = vld [vmem:[%s4 + $0x8] sm:$0xff]
      %v563 = vld [vmem:[%s4 + $0x10] sm:$0xff]
      %v564 = vld [vmem:[%s4 + $0x18] sm:$0xff]
      %v565 = vld [vmem:[%s4 + $0x20] sm:$0xff]
      %v566 = vld [vmem:[%s4 + $0x28] sm:$0xff]
      %v567 = vld [vmem:[%s4 + $0x30] sm:$0xff]
      %v568 = vld [vmem:[%s4 + $0x38] sm:$0xff]
      %v570 = vsel %vm391, %v560, 0
      %572 = vmatprep.subr.mxu0 0.0
      %573 = vmatpush1.msra.mxu0 %v561
      %574 = vmatprep.subr.mxu0 0.0
      %575 = vmatpush1.msra.mxu0 %v562
      %576 = vmatprep.subr.mxu0 0.0
      %577 = vmatpush1.msra.mxu0 %v563
      %578 = vmatprep.subr.mxu0 0.0
      %579 = vmatpush1.msra.mxu0 %v564
      %580 = vmatprep.subr.mxu0 0.0
      %581 = vmatpush1.msra.mxu0 %v565
      %582 = vmatprep.subr.mxu0 0.0
      %583 = vmatpush1.msra.mxu0 %v566
      %584 = vmatprep.subr.mxu0 0.0
      %585 = vmatpush1.msra.mxu0 %v567
      %586 = vmatprep.subr.mxu0 0.0
      %587 = vmatpush1.msra.mxu0 %v568
      %588 = vmatprep.subr.mxu0 0.0
      %589 = vmatpush1.msra.mxu0 0.0
      %590 = vmatprep.subr.mxu0 0.0
      %591 = vmatpush1.msra.mxu0 0.0
      %592 = vmatprep.subr.mxu0 0.0
      %593 = vmatpush1.msra.mxu0 0.0
      %594 = vmatprep.subr.mxu0 0.0
      %595 = vmatpush1.msra.mxu0 0.0
      %596 = vmatprep.subr.mxu0 0.0
      %597 = vmatpush1.msra.mxu0 0.0
      %598 = vmatprep.subr.mxu0 0.0
      %599 = vmatpush1.msra.mxu0 0.0
      %600 = vmatprep.subr.mxu0 0.0
      %601 = vmatpush1.msra.mxu0 0.0
      %602 = vmatprep.subr.mxu0 0.0
      %603 = vmatpush1.msra.mxu0 0.0
      %604 = vmatprep.subr.mxu0 0.0
      %605 = vmatpush1.msra.mxu0 0.0
      %606 = vmatprep.subr.mxu0 0.0
      %607 = vmatpush1.msra.mxu0 0.0
      %608 = vmatprep.subr.mxu0 0.0
      %609 = vmatpush1.msra.mxu0 0.0
      %610 = vmatprep.subr.mxu0 0.0
      %611 = vmatpush1.msra.mxu0 0.0
      %612 = vmatprep.subr.mxu0 0.0
      %613 = vmatpush1.msra.mxu0 0.0
      %614 = vmatprep.subr.mxu0 0.0
      %615 = vmatpush1.msra.mxu0 0.0
      %616 = vmatprep.subr.mxu0 0.0
      %617 = vmatpush1.msra.mxu0 0.0
      %618 = vmatprep.subr.mxu0 0.0
      %619 = vmatpush1.msra.mxu0 0.0
      %620 = vmatprep.subr.mxu0 0.0
      %621 = vmatpush1.msra.mxu0 0.0
      %622 = vmatprep.subr.mxu0 0.0
      %623 = vmatpush1.msra.mxu0 0.0
      %624 = vmatprep.subr.mxu0 0.0
      %625 = vmatpush1.msra.mxu0 0.0
      %626 = vmatprep.subr.mxu0 0.0
      %627 = vmatpush1.msra.mxu0 0.0
      %628 = vmatprep.subr.mxu0 0.0
      %629 = vmatpush1.msra.mxu0 0.0
      %630 = vmatprep.subr.mxu0 0.0
      %631 = vmatpush1.msra.mxu0 0.0
      %632 = vmatprep.subr.mxu0 0.0
      %633 = vmatpush1.msra.mxu0 0.0
      %634 = vmatprep.subr.mxu0 0.0
      %635 = vmatpush1.msra.mxu0 0.0
      %636 = vmatprep.mubr.f32.mxu0 0.0
      %637 = vmatmul.mubr.f32.gmra.mrb[0].mxu0 %v570
      %v638 = vpop.f32.mrb[0].mxu0
      %v639 = vadd.f32 0.0, %v638
      %v640 = vpop.f32.mrb[0].mxu0
      %641 = vdwg.mxu0
      %v642 = vadd.f32 %v557, %v639
      %v643 = vlaneseq
      %v644 = vshrl.u32 %v643, 7
      %v645 = vsub.s32 0, %v644
      %v646 = vrot.slane %v280, %v645
      %v647 = vadd.f32 %v642, %v646
      %v648 = vld [vmem:[%s5] sm:$0xff]
      %v649 = vld [vmem:[%s5 + $0x8] sm:$0xff]
      %v650 = vld [vmem:[%s5 + $0x10] sm:$0xff]
      %v651 = vld [vmem:[%s5 + $0x18] sm:$0xff]
      %v652 = vld [vmem:[%s5 + $0x20] sm:$0xff]
      %v653 = vld [vmem:[%s5 + $0x28] sm:$0xff]
      %v654 = vld [vmem:[%s5 + $0x30] sm:$0xff]
      %v655 = vld [vmem:[%s5 + $0x38] sm:$0xff]
      %v656 = vld [vmem:[%s5 + $0x40] sm:$0xff]
      %v657 = vld [vmem:[%s5 + $0x48] sm:$0xff]
      %v658 = vld [vmem:[%s5 + $0x50] sm:$0xff]
      %v659 = vld [vmem:[%s5 + $0x58] sm:$0xff]
      %v660 = vld [vmem:[%s5 + $0x60] sm:$0xff]
      %v661 = vld [vmem:[%s5 + $0x68] sm:$0xff]
      %v662 = vld [vmem:[%s5 + $0x70] sm:$0xff]
      %v663 = vld [vmem:[%s5 + $0x78] sm:$0xff]
      %v665 = vlaneseq
      %v666 = vshrl.u32 %v665, 7
      %v667 = vsub.s32 0, %v666
      %v668 = vrot.slane %v282, %v667
      %v669 = vlaneseq
      %v670 = vshrl.u32 %v669, 7
      %v671 = vsub.s32 1, %v670
      %v672 = vrot.slane %v282, %v671
      %v676 = vsel %vm391, %v647, 0
      %678 = vmatprep.subr.mxu0 %v649
      %679 = vmatpush1.msra.mxu0 %v648
      %680 = vmatprep.subr.mxu0 %v651
      %681 = vmatpush1.msra.mxu0 %v650
      %682 = vmatprep.subr.mxu0 %v653
      %683 = vmatpush1.msra.mxu0 %v652
      %684 = vmatprep.subr.mxu0 %v655
      %685 = vmatpush1.msra.mxu0 %v654
      %686 = vmatprep.subr.mxu0 %v657
      %687 = vmatpush1.msra.mxu0 %v656
      %688 = vmatprep.subr.mxu0 %v659
      %689 = vmatpush1.msra.mxu0 %v658
      %690 = vmatprep.subr.mxu0 %v661
      %691 = vmatpush1.msra.mxu0 %v660
      %692 = vmatprep.subr.mxu0 %v663
      %693 = vmatpush1.msra.mxu0 %v662
      %694 = vmatprep.subr.mxu0 0.0
      %695 = vmatpush1.msra.mxu0 0.0
      %696 = vmatprep.subr.mxu0 0.0
      %697 = vmatpush1.msra.mxu0 0.0
      %698 = vmatprep.subr.mxu0 0.0
      %699 = vmatpush1.msra.mxu0 0.0
      %700 = vmatprep.subr.mxu0 0.0
      %701 = vmatpush1.msra.mxu0 0.0
      %702 = vmatprep.subr.mxu0 0.0
      %703 = vmatpush1.msra.mxu0 0.0
      %704 = vmatprep.subr.mxu0 0.0
      %705 = vmatpush1.msra.mxu0 0.0
      %706 = vmatprep.subr.mxu0 0.0
      %707 = vmatpush1.msra.mxu0 0.0
      %708 = vmatprep.subr.mxu0 0.0
      %709 = vmatpush1.msra.mxu0 0.0
      %710 = vmatprep.subr.mxu0 0.0
      %711 = vmatpush1.msra.mxu0 0.0
      %712 = vmatprep.subr.mxu0 0.0
      %713 = vmatpush1.msra.mxu0 0.0
      %714 = vmatprep.subr.mxu0 0.0
      %715 = vmatpush1.msra.mxu0 0.0
      %716 = vmatprep.subr.mxu0 0.0
      %717 = vmatpush1.msra.mxu0 0.0
      %718 = vmatprep.subr.mxu0 0.0
      %719 = vmatpush1.msra.mxu0 0.0
      %720 = vmatprep.subr.mxu0 0.0
      %721 = vmatpush1.msra.mxu0 0.0
      %722 = vmatprep.subr.mxu0 0.0
      %723 = vmatpush1.msra.mxu0 0.0
      %724 = vmatprep.subr.mxu0 0.0
      %725 = vmatpush1.msra.mxu0 0.0
      %726 = vmatprep.subr.mxu0 0.0
      %727 = vmatpush1.msra.mxu0 0.0
      %728 = vmatprep.subr.mxu0 0.0
      %729 = vmatpush1.msra.mxu0 0.0
      %730 = vmatprep.subr.mxu0 0.0
      %731 = vmatpush1.msra.mxu0 0.0
      %732 = vmatprep.subr.mxu0 0.0
      %733 = vmatpush1.msra.mxu0 0.0
      %734 = vmatprep.subr.mxu0 0.0
      %735 = vmatpush1.msra.mxu0 0.0
      %736 = vmatprep.subr.mxu0 0.0
      %737 = vmatpush1.msra.mxu0 0.0
      %738 = vmatprep.subr.mxu0 0.0
      %739 = vmatpush1.msra.mxu0 0.0
      %740 = vmatprep.subr.mxu0 0.0
      %741 = vmatpush1.msra.mxu0 0.0
      %742 = vmatprep.mubr.f32.mxu0 0.0
      %743 = vmatmul.mubr.f32.gmra.mrb[0].mxu0 %v676
      %v744 = vpop.f32.mrb[0].mxu0
      %v745 = vadd.f32 %v668, %v744
      %v746 = vpop.f32.mrb[0].mxu0
      %v747 = vadd.f32 %v672, %v746
      %748 = vdwg.mxu0
      %v749 = vmax.f32 %v745, 0.0
      %v750 = vmax.f32 %v747, 0.0
      %v751 = vadd.f32 %v749, %v283
      %v752 = vadd.f32 %v750, %v284
      %753 = vst [vmem:[%s278] sm:$0xff] %v751
      %754 = vst [vmem:[%s278 + $0x8] sm:$0xff] %v752
      %p755 = scmp.lt.s32.totalorder %s18, 1
      %s756 = scalar_select %p755, %s18, 1
      %s757 = smul.addr %s756, 2
      %s758 = smul.addr %s757, 8
      %s759 = scalar_lea.vmem %s7, %s758
      // Predicated region
      $region49: #{_lambda_.3} parent=47 // pred_check
        %p760 = pneg %p188
      $region50: #{_lambda_.3} parent=47 // pred_check_branch
        %762 = sbr.rel (%p760) target = $region52
      $region51: #{_lambda_.3} parent=47 // pred_region
        _
      $region52: #{_lambda_.3} parent=47 // pred_fallthru
        _
    $region48: #{_lambda_.3} parent=5 // pred_fallthru
      _
    %p763 = scmp.le.s32.totalorder 2, %s13
    // Predicated region
    $region53: #{_lambda_.3} parent=5 // pred_check
      %p764 = pneg %p763
    $region54: #{_lambda_.3} parent=5 // pred_check_branch
      %766 = sbr.rel (%p764) target = $region56
    $region55: #{_lambda_.3} parent=5 // pred_region
      %s767 = ssub.s32 %s13, 2
      // Predicated region
      $region57: #{_lambda_.3} parent=55 // pred_check
        %p768 = pneg %p194
      $region58: #{_lambda_.3} parent=55 // pred_check_branch
        %770 = sbr.rel (%p768) target = $region60
      $region59: #{_lambda_.3} parent=55 // pred_region
        %p771 = scmp.lt.s32.totalorder %s19, 1
        %s772 = scalar_select %p771, %s19, 1
        %s773 = smul.addr %s772, 2
        %s774 = smul.addr %s773, 8
        %s775 = scalar_lea.vmem %s7, %s774
      $region60: #{_lambda_.3} parent=55 // pred_fallthru
        _
    $region56: #{_lambda_.3} parent=5 // pred_fallthru
      _
  $region6: #{_lambda_.3} parent=0 // loop_footer
    %s17 = sadd.s32 1, %s13
  $region7: #{_lambda_.3} parent=0 // loop_footer_branch
    %12 = sbr.rel target = $region3
  $region8: #{_lambda_.3} parent=0 // loop_exit
    _

// kernel: _lambda_.2
$region0: #{_lambda_.2}
  #allocation0 [shape = 'u32[]', space=smem, size = 0x4, offset = 0x4, fixed_abs, tag = 'smem constant byte address 0x4 - core index']
  #allocation1 [shape = 'u32[144,128]{1,0:T(1,128)}', space=vmem, size = 0x12000, scoped, tag = 'internal scratch']
  #allocation2 [shape = 'f32[9,128]{1,0:T(8,128)}', space=vmem, size = 0x2000, scoped, tag = 'scratch operand']
  %s0 = inlined_call_operand.vmem [shape: f32[2,2,8,256], index: 0, kind: input, shape index: {}]
  %s1 = inlined_call_operand.hbm [shape: f32[256,128], index: 1, kind: input, shape index: {}]
  %s2 = inlined_call_operand.hbm [shape: f32[128,64], index: 2, kind: input, shape index: {}]
  %s3 = inlined_call_operand.hbm [shape: f32[128,64], index: 3, kind: input, shape index: {}]
  %s4 = inlined_call_operand.hbm [shape: f32[128,64], index: 4, kind: input, shape index: {}]
  %s5 = inlined_call_operand.vmem [shape: f32[64,256], index: 5, kind: input, shape index: {}]
  %s6 = inlined_call_operand.vmem [shape: f32[256,256], index: 6, kind: input, shape index: {}]
  %s7 = inlined_call_operand.vmem [shape: f32[4,256], index: 7, kind: input, shape index: {}]
  %s8 = inlined_call_operand.vmem [shape: f32[2,8,256], index: 8, kind: output, shape index: {}]
  %s9 = sld [smem:[#allocation0]]
  $region81: #{_lambda_.2} parent=0
    _
  %s11 = ssub.s32 1, %s9
  %s12 = scalar_select 0, %s11, %s9
  $region1: #{_lambda_.2} parent=0
    #allocation3 [shape = 'u8[131072]{0}', space=vmem, size = 0x20000, scoped, tag = 'input window, operand 1, single buffered']
    #allocation4 [shape = 's32[2]{0}', space=sflag, size = 0x8, scoped, tag = 'scoped memory for _lambda_.2']
    #allocation5 [shape = 'u8[65536]{0}', space=vmem, size = 0x10000, scoped, tag = 'input window, operand 2, single buffered']
    #allocation6 [shape = 's32[1]{0}', space=sflag, size = 0x4, scoped, tag = 'scoped memory for _lambda_.2']
    #allocation7 [shape = 'u8[65536]{0}', space=vmem, size = 0x10000, scoped, tag = 'input window, operand 3, single buffered']
    #allocation8 [shape = 'u8[65536]{0}', space=vmem, size = 0x10000, scoped, tag = 'input window, operand 4, single buffered']
    #allocation9 [shape = 's32[1]{0}', space=sflag, size = 0x4, scoped, tag = 'scoped memory for _lambda_.2']
    %13 = vsyncpa [#allocation4], 0
    %14 = vsyncpa [#allocation6], 0
    %15 = vsyncpa [#allocation9], 0
    loop: start=0, step=1, limit=4
    $region2: #{_lambda_.2} parent=1 // loop_pre_header
      _
    $region3: #{_lambda_.2} parent=1 // loop_header
      %s17 = sphi 0, %s21
      %p18 = scmp.ge.s32.totalorder %s17, 4
      %s27 = sphi 0, %s29
      %s30 = sphi 0, %s27
      %s31 = sphi 0, %s30
      %s47 = sphi 0, %s31
      %s51 = sphi 0, %s51
      %s53 = sphi 0, %s51
      %s54 = sphi 0, %s53
      %s68 = sphi 0, %s54
      %s72 = sphi 0, %s72
      %s74 = sphi 0, %s72
      %s75 = sphi 0, %s74
      %s89 = sphi 0, %s75
      %s93 = sphi 0, %s93
      %s95 = sphi 0, %s93
      %s96 = sphi 0, %s95
      %s110 = sphi 0, %s96
      %s114 = sphi 0, %s114
      %s116 = sphi 0, %s114
      %s117 = sphi 0, %s116
      %s131 = sphi 0, %s117
      %s135 = sphi 0, %s135
      %s137 = sphi 0, %s135
      %s138 = sphi 0, %s137
      %s152 = sphi 0, %s138
      %s156 = sphi 0, %s156
      %s158 = sphi 0, %s156
      %s159 = sphi 0, %s158
      %s173 = sphi 0, %s159
      %s177 = sphi 0, %s177
      %s179 = sphi 0, %s177
      %s180 = sphi 0, %s179
      %s194 = sphi 0, %s180
      %s200 = sphi 0, %s202
      %s203 = sphi 0, %s200
      %s204 = sphi 0, %s203
      %s220 = sphi 0, %s204
    $region4: #{_lambda_.2} parent=1 // loop_header_branch
      %20 = sbr.rel (%p18) target = $region8
    $region5: #{_lambda_.2} parent=1 // loop_body
      %s22 = ssub.s32 %s17, 1
      %s23 = ssub.s32 %s17, 2
      %s24 = sadd.s32 %s17, 1
      %s25 = ssub.s32 %s17, %s24
      %p26 = scmp.eq.s32.totalorder %s25, 0
      %s28 = sadd.s32 %s27, 1
      %s29 = scalar_select %p26, %s27, %s28
      %p32 = pneg %p26
      %p33 = scmp.eq.s32.totalorder %s17, 1
      %p34 = por %p32, %p33
      %p35 = scmp.ne.s32.totalorder %s27, %s30
      %p36 = scmp.eq.s32.totalorder %s17, 0
      %p37 = por %p35, %p36
      %p38 = scmp.ne.s32.totalorder %s27, %s30
      %p39 = scmp.eq.s32.totalorder %s22, 1
      %p40 = por %p38, %p39
      %p41 = scmp.ne.s32.totalorder %s30, %s31
      %p42 = scmp.eq.s32.totalorder %s22, 0
      %p43 = por %p41, %p42
      %p44 = scmp.ne.s32.totalorder %s30, %s31
      %p45 = scmp.eq.s32.totalorder %s23, 1
      %p46 = por %p44, %p45
      %p48 = scmp.ne.s32.totalorder %s31, %s47
      %p49 = scmp.eq.s32.totalorder %s23, 0
      %p50 = por %p48, %p49
      %s52 = sadd.s32 %s51, 1
      %p55 = scmp.eq.s32.totalorder %s17, 1
      %p56 = scmp.ne.s32.totalorder %s51, %s53
      %p57 = scmp.eq.s32.totalorder %s17, 0
      %p58 = por %p56, %p57
      %p59 = scmp.ne.s32.totalorder %s51, %s53
      %p60 = scmp.eq.s32.totalorder %s22, 1
      %p61 = por %p59, %p60
      %p62 = scmp.ne.s32.totalorder %s53, %s54
      %p63 = scmp.eq.s32.totalorder %s22, 0
      %p64 = por %p62, %p63
      %p65 = scmp.ne.s32.totalorder %s53, %s54
      %p66 = scmp.eq.s32.totalorder %s23, 1
      %p67 = por %p65, %p66
      %p69 = scmp.ne.s32.totalorder %s54, %s68
      %p70 = scmp.eq.s32.totalorder %s23, 0
      %p71 = por %p69, %p70
      %s73 = sadd.s32 %s72, 1
      %p76 = scmp.eq.s32.totalorder %s17, 1
      %p77 = scmp.ne.s32.totalorder %s72, %s74
      %p78 = scmp.eq.s32.totalorder %s17, 0
      %p79 = por %p77, %p78
      %p80 = scmp.ne.s32.totalorder %s72, %s74
      %p81 = scmp.eq.s32.totalorder %s22, 1
      %p82 = por %p80, %p81
      %p83 = scmp.ne.s32.totalorder %s74, %s75
      %p84 = scmp.eq.s32.totalorder %s22, 0
      %p85 = por %p83, %p84
      %p86 = scmp.ne.s32.totalorder %s74, %s75
      %p87 = scmp.eq.s32.totalorder %s23, 1
      %p88 = por %p86, %p87
      %p90 = scmp.ne.s32.totalorder %s75, %s89
      %p91 = scmp.eq.s32.totalorder %s23, 0
      %p92 = por %p90, %p91
      %s94 = sadd.s32 %s93, 1
      %p97 = scmp.eq.s32.totalorder %s17, 1
      %p98 = scmp.ne.s32.totalorder %s93, %s95
      %p99 = scmp.eq.s32.totalorder %s17, 0
      %p100 = por %p98, %p99
      %p101 = scmp.ne.s32.totalorder %s93, %s95
      %p102 = scmp.eq.s32.totalorder %s22, 1
      %p103 = por %p101, %p102
      %p104 = scmp.ne.s32.totalorder %s95, %s96
      %p105 = scmp.eq.s32.totalorder %s22, 0
      %p106 = por %p104, %p105
      %p107 = scmp.ne.s32.totalorder %s95, %s96
      %p108 = scmp.eq.s32.totalorder %s23, 1
      %p109 = por %p107, %p108
      %p111 = scmp.ne.s32.totalorder %s96, %s110
      %p112 = scmp.eq.s32.totalorder %s23, 0
      %p113 = por %p111, %p112
      %s115 = sadd.s32 %s114, 1
      %p118 = scmp.eq.s32.totalorder %s17, 1
      %p119 = scmp.ne.s32.totalorder %s114, %s116
      %p120 = scmp.eq.s32.totalorder %s17, 0
      %p121 = por %p119, %p120
      %p122 = scmp.ne.s32.totalorder %s114, %s116
      %p123 = scmp.eq.s32.totalorder %s22, 1
      %p124 = por %p122, %p123
      %p125 = scmp.ne.s32.totalorder %s116, %s117
      %p126 = scmp.eq.s32.totalorder %s22, 0
      %p127 = por %p125, %p126
      %p128 = scmp.ne.s32.totalorder %s116, %s117
      %p129 = scmp.eq.s32.totalorder %s23, 1
      %p130 = por %p128, %p129
      %p132 = scmp.ne.s32.totalorder %s117, %s131
      %p133 = scmp.eq.s32.totalorder %s23, 0
      %p134 = por %p132, %p133
      %s136 = sadd.s32 %s135, 1
      %p139 = scmp.eq.s32.totalorder %s17, 1
      %p140 = scmp.ne.s32.totalorder %s135, %s137
      %p141 = scmp.eq.s32.totalorder %s17, 0
      %p142 = por %p140, %p141
      %p143 = scmp.ne.s32.totalorder %s135, %s137
      %p144 = scmp.eq.s32.totalorder %s22, 1
      %p145 = por %p143, %p144
      %p146 = scmp.ne.s32.totalorder %s137, %s138
      %p147 = scmp.eq.s32.totalorder %s22, 0
      %p148 = por %p146, %p147
      %p149 = scmp.ne.s32.totalorder %s137, %s138
      %p150 = scmp.eq.s32.totalorder %s23, 1
      %p151 = por %p149, %p150
      %p153 = scmp.ne.s32.totalorder %s138, %s152
      %p154 = scmp.eq.s32.totalorder %s23, 0
      %p155 = por %p153, %p154
      %s157 = sadd.s32 %s156, 1
      %p160 = scmp.eq.s32.totalorder %s17, 1
      %p161 = scmp.ne.s32.totalorder %s156, %s158
      %p162 = scmp.eq.s32.totalorder %s17, 0
      %p163 = por %p161, %p162
      %p164 = scmp.ne.s32.totalorder %s156, %s158
      %p165 = scmp.eq.s32.totalorder %s22, 1
      %p166 = por %p164, %p165
      %p167 = scmp.ne.s32.totalorder %s158, %s159
      %p168 = scmp.eq.s32.totalorder %s22, 0
      %p169 = por %p167, %p168
      %p170 = scmp.ne.s32.totalorder %s158, %s159
      %p171 = scmp.eq.s32.totalorder %s23, 1
      %p172 = por %p170, %p171
      %p174 = scmp.ne.s32.totalorder %s159, %s173
      %p175 = scmp.eq.s32.totalorder %s23, 0
      %p176 = por %p174, %p175
      %s178 = sadd.s32 %s177, 1
      %p181 = scmp.eq.s32.totalorder %s17, 1
      %p182 = scmp.ne.s32.totalorder %s177, %s179
      %p183 = scmp.eq.s32.totalorder %s17, 0
      %p184 = por %p182, %p183
      %p185 = scmp.ne.s32.totalorder %s177, %s179
      %p186 = scmp.eq.s32.totalorder %s22, 1
      %p187 = por %p185, %p186
      %p188 = scmp.ne.s32.totalorder %s179, %s180
      %p189 = scmp.eq.s32.totalorder %s22, 0
      %p190 = por %p188, %p189
      %p191 = scmp.ne.s32.totalorder %s179, %s180
      %p192 = scmp.eq.s32.totalorder %s23, 1
      %p193 = por %p191, %p192
      %p195 = scmp.ne.s32.totalorder %s180, %s194
      %p196 = scmp.eq.s32.totalorder %s23, 0
      %p197 = por %p195, %p196
      %s198 = ssub.s32 %s17, %s24
      %p199 = scmp.eq.s32.totalorder %s198, 0
      %s201 = sadd.s32 %s200, 1
      %s202 = scalar_select %p199, %s200, %s201
      %p205 = pneg %p199
      %p206 = scmp.eq.s32.totalorder %s17, 1
      %p207 = por %p205, %p206
      %p208 = scmp.ne.s32.totalorder %s200, %s203
      %p209 = scmp.eq.s32.totalorder %s17, 0
      %p210 = por %p208, %p209
      %p211 = scmp.ne.s32.totalorder %s200, %s203
      %p212 = scmp.eq.s32.totalorder %s22, 1
      %p213 = por %p211, %p212
      %p214 = scmp.ne.s32.totalorder %s203, %s204
      %p215 = scmp.eq.s32.totalorder %s22, 0
      %p216 = por %p214, %p215
      %p217 = scmp.ne.s32.totalorder %s203, %s204
      %p218 = scmp.eq.s32.totalorder %s23, 1
      %p219 = por %p217, %p218
      %p221 = scmp.ne.s32.totalorder %s204, %s220
      %p222 = scmp.eq.s32.totalorder %s23, 0
      %p223 = por %p221, %p222
      %p224 = scmp.le.s32.totalorder 1, %s17
      %p225 = scmp.lt.s32.totalorder %s17, 3
      %p226 = pnand %p224, %p225
      %p227 = pneg %p226
      // Predicated region
      $region9: #{_lambda_.2} parent=5 // pred_check
        _
      $region10: #{_lambda_.2} parent=5 // pred_check_branch
        %229 = sbr.rel (%p226) target = $region12
      $region11: #{_lambda_.2} parent=5 // pred_region
        %s230 = ssub.s32 %s17, 1
        // Predicated region
        $region13: #{_lambda_.2} parent=11 // pred_check
          %p231 = pneg %p64
        $region14: #{_lambda_.2} parent=11 // pred_check_branch
          %233 = sbr.rel (%p231) target = $region16
        $region15: #{_lambda_.2} parent=11 // pred_region
          %s235 = ssub.s32 4096, 4096
          %236 = vsyncadd [#allocation4], %s235
          %s237 = sshll.u32 [#allocation3], 4
          %s238 = int_to_ptr.vmem [resolvable:$true] %s237
          %243 = dma.hbm_to_vmem [thread:$0]  %s1, 4096, %s238, [#allocation4], 128, 128, 8
        $region16: #{_lambda_.2} parent=11 // pred_fallthru
          _
        // Predicated region
        $region17: #{_lambda_.2} parent=11 // pred_check
          %p244 = pneg %p85
        $region18: #{_lambda_.2} parent=11 // pred_check_branch
          %246 = sbr.rel (%p244) target = $region20
        $region19: #{_lambda_.2} parent=11 // pred_region
          %s248 = ssub.s32 2048, 2048
          %249 = vsyncadd [#allocation6], %s248
          %s250 = sshll.u32 [#allocation5], 4
          %s251 = int_to_ptr.vmem [resolvable:$true] %s250
          %256 = dma.hbm_to_vmem [thread:$0]  %s2, 2048, %s251, [#allocation6], 128, 128, 8
        $region20: #{_lambda_.2} parent=11 // pred_fallthru
          _
        // Predicated region
        $region21: #{_lambda_.2} parent=11 // pred_check
          %p257 = pneg %p106
        $region22: #{_lambda_.2} parent=11 // pred_check_branch
          %259 = sbr.rel (%p257) target = $region24
        $region23: #{_lambda_.2} parent=11 // pred_region
          %s261 = ssub.s32 2048, 2048
          %262 = vsyncadd [#allocation6], %s261
          %s263 = sshll.u32 [#allocation7], 4
          %s264 = int_to_ptr.vmem [resolvable:$true] %s263
          %269 = dma.hbm_to_vmem [thread:$0]  %s3, 2048, %s264, [#allocation6], 128, 128, 8
        $region24: #{_lambda_.2} parent=11 // pred_fallthru
          _
        // Predicated region
        $region25: #{_lambda_.2} parent=11 // pred_check
          %p270 = pneg %p127
        $region26: #{_lambda_.2} parent=11 // pred_check_branch
          %272 = sbr.rel (%p270) target = $region28
        $region27: #{_lambda_.2} parent=11 // pred_region
          %s274 = ssub.s32 2048, 2048
          %275 = vsyncadd [#allocation9], %s274
          %s276 = sshll.u32 [#allocation8], 4
          %s277 = int_to_ptr.vmem [resolvable:$true] %s276
          %282 = dma.hbm_to_vmem [thread:$0]  %s4, 2048, %s277, [#allocation9], 128, 128, 8
        $region28: #{_lambda_.2} parent=11 // pred_fallthru
          _
        // Predicated region
        $region29: #{_lambda_.2} parent=11 // pred_check
          %p283 = pneg %p148
        $region30: #{_lambda_.2} parent=11 // pred_check_branch
          %285 = sbr.rel (%p283) target = $region32
        $region31: #{_lambda_.2} parent=11 // pred_region
          _
        $region32: #{_lambda_.2} parent=11 // pred_fallthru
          _
        // Predicated region
        $region33: #{_lambda_.2} parent=11 // pred_check
          %p286 = pneg %p169
        $region34: #{_lambda_.2} parent=11 // pred_check_branch
          %288 = sbr.rel (%p286) target = $region36
        $region35: #{_lambda_.2} parent=11 // pred_region
          _
        $region36: #{_lambda_.2} parent=11 // pred_fallthru
          _
        // Predicated region
        $region37: #{_lambda_.2} parent=11 // pred_check
          %p289 = pneg %p190
        $region38: #{_lambda_.2} parent=11 // pred_check_branch
          %291 = sbr.rel (%p289) target = $region40
        $region39: #{_lambda_.2} parent=11 // pred_region
          _
        $region40: #{_lambda_.2} parent=11 // pred_fallthru
          _
      $region12: #{_lambda_.2} parent=5 // pred_fallthru
        _
      %p292 = scmp.lt.s32.totalorder %s17, 2
      // Predicated region
      $region41: #{_lambda_.2} parent=5 // pred_check
        %p293 = pneg %p292
      $region42: #{_lambda_.2} parent=5 // pred_check_branch
        %295 = sbr.rel (%p293) target = $region44
      $region43: #{_lambda_.2} parent=5 // pred_region
        // Predicated region
        $region45: #{_lambda_.2} parent=43 // pred_check
          %p296 = pneg %p37
        $region46: #{_lambda_.2} parent=43 // pred_check_branch
          %298 = sbr.rel (%p296) target = $region48
        $region47: #{_lambda_.2} parent=43 // pred_region
          %p299 = scmp.lt.s32.totalorder %s17, 1
          %s300 = scalar_select %p299, %s17, 1
          %s301 = smul.addr %s300, 4
          %s302 = smul.addr %s301, 8
          %s303 = scalar_lea.vmem %s0, %s302
        $region48: #{_lambda_.2} parent=43 // pred_fallthru
          _
      $region44: #{_lambda_.2} parent=5 // pred_fallthru
        _
      %p304 = scmp.le.s32.totalorder 1, %s17
      %p305 = scmp.lt.s32.totalorder %s17, 3
      %p306 = pnand %p304, %p305
      %p307 = pneg %p306
      // Predicated region
      $region49: #{_lambda_.2} parent=5 // pred_check
        _
      $region50: #{_lambda_.2} parent=5 // pred_check_branch
        %309 = sbr.rel (%p306) target = $region52
      $region51: #{_lambda_.2} parent=5 // pred_region
        %s310 = ssub.s32 %s17, 1
        // Predicated region
        $region53: #{_lambda_.2} parent=51 // pred_check
          %p311 = pneg %p64
        $region54: #{_lambda_.2} parent=51 // pred_check_branch
          %313 = sbr.rel (%p311) target = $region56
        $region55: #{_lambda_.2} parent=51 // pred_region
          %314 = dma.done [#allocation4], 4096
        $region56: #{_lambda_.2} parent=51 // pred_fallthru
          _
        // Predicated region
        $region57: #{_lambda_.2} parent=51 // pred_check
          %p315 = pneg %p85
        $region58: #{_lambda_.2} parent=51 // pred_check_branch
          %317 = sbr.rel (%p315) target = $region60
        $region59: #{_lambda_.2} parent=51 // pred_region
          %318 = dma.done [#allocation6], 2048
        $region60: #{_lambda_.2} parent=51 // pred_fallthru
          _
        // Predicated region
        $region61: #{_lambda_.2} parent=51 // pred_check
          %p319 = pneg %p106
        $region62: #{_lambda_.2} parent=51 // pred_check_branch
          %321 = sbr.rel (%p319) target = $region64
        $region63: #{_lambda_.2} parent=51 // pred_region
          %322 = dma.done [#allocation6], 2048
        $region64: #{_lambda_.2} parent=51 // pred_fallthru
          _
        // Predicated region
        $region65: #{_lambda_.2} parent=51 // pred_check
          %p323 = pneg %p127
        $region66: #{_lambda_.2} parent=51 // pred_check_branch
          %325 = sbr.rel (%p323) target = $region68
        $region67: #{_lambda_.2} parent=51 // pred_region
          %326 = dma.done [#allocation9], 2048
        $region68: #{_lambda_.2} parent=51 // pred_fallthru
          _
        %p327 = scmp.lt.s32.totalorder %s22, 1
        %s328 = scalar_select %p327, %s22, 1
        %s329 = smul.addr %s328, 4
        %s330 = smul.addr %s329, 8
        %s331 = scalar_lea.vmem %s0, %s330
        %p332 = pneg %p43
        %p333 = pneg %p40
        %p334 = pneg %p64
        %p335 = pneg %p61
        %p336 = pneg %p85
        %p337 = pneg %p82
        %p338 = pneg %p106
        %p339 = pneg %p103
        %p340 = pneg %p127
        %p341 = pneg %p124
        %p342 = pneg %p148
        %p343 = pneg %p145
        %p344 = pneg %p169
        %p345 = pneg %p166
        %p346 = pneg %p190
        %p347 = pneg %p187
        %p348 = pneg %p216
        %p349 = pneg %p213
        %p350 = scmp.lt.s32.totalorder %s22, 1
        %s351 = scalar_select %p350, %s22, 1
        %s352 = smul.addr %s351, 2
        %s353 = smul.addr %s352, 8
        %s354 = scalar_lea.vmem %s8, %s353
        %p355 = scmp.lt.s32.totalorder %s22, 1
        %s356 = scalar_select %p355, %s22, 1
        %s357 = smul.addr %s356, 4
        %s358 = smul.addr %s357, 8
        %s359 = scalar_lea.vmem %s0, %s358
        %p360 = scmp.lt.s32.totalorder %s22, 1
        %s361 = scalar_select %p360, %s22, 1
        %s362 = smul.addr %s361, 2
        %s363 = smul.addr %s362, 8
        %s364 = scalar_lea.vmem %s8, %s363
        %v365 = vld [vmem:[%s7] sm:$0x1]
        %v366 = vld [vmem:[%s7 + $0x1] sm:$0x1]
        %s367 = scalar_lea.vmem %s7, 2
        %v368 = vld [vmem:[%s367] ss:$4 sm:$0x3]
        %v369 = vld [vmem:[%s359] sm:$0xff]
        %v370 = vld [vmem:[%s359 + $0x8] sm:$0xff]
        %s371 = scalar_lea.vmem %s359, 16
        %v372 = vld [vmem:[%s371] sm:$0xff]
        %v373 = vld [vmem:[%s371 + $0x8] sm:$0xff]
        %v374 = vld [vmem:[#allocation3] sm:$0xff]
        %v375 = vld [vmem:[#allocation3 + $0x8] sm:$0xff]
        %v376 = vld [vmem:[#allocation3 + $0x10] sm:$0xff]
        %v377 = vld [vmem:[#allocation3 + $0x18] sm:$0xff]
        %v378 = vld [vmem:[#allocation3 + $0x20] sm:$0xff]
        %v379 = vld [vmem:[#allocation3 + $0x28] sm:$0xff]
        %v380 = vld [vmem:[#allocation3 + $0x30] sm:$0xff]
        %v381 = vld [vmem:[#allocation3 + $0x38] sm:$0xff]
        %v382 = vld [vmem:[#allocation3 + $0x40] sm:$0xff]
        %v383 = vld [vmem:[#allocation3 + $0x48] sm:$0xff]
        %v384 = vld [vmem:[#allocation3 + $0x50] sm:$0xff]
        %v385 = vld [vmem:[#allocation3 + $0x58] sm:$0xff]
        %v386 = vld [vmem:[#allocation3 + $0x60] sm:$0xff]
        %v387 = vld [vmem:[#allocation3 + $0x68] sm:$0xff]
        %v388 = vld [vmem:[#allocation3 + $0x70] sm:$0xff]
        %v389 = vld [vmem:[#allocation3 + $0x78] sm:$0xff]
        %v390 = vld [vmem:[#allocation3 + $0x80] sm:$0xff]
        %v391 = vld [vmem:[#allocation3 + $0x88] sm:$0xff]
        %v392 = vld [vmem:[#allocation3 + $0x90] sm:$0xff]
        %v393 = vld [vmem:[#allocation3 + $0x98] sm:$0xff]
        %v394 = vld [vmem:[#allocation3 + $0xa0] sm:$0xff]
        %v395 = vld [vmem:[#allocation3 + $0xa8] sm:$0xff]
        %v396 = vld [vmem:[#allocation3 + $0xb0] sm:$0xff]
        %v397 = vld [vmem:[#allocation3 + $0xb8] sm:$0xff]
        %v398 = vld [vmem:[#allocation3 + $0xc0] sm:$0xff]
        %v399 = vld [vmem:[#allocation3 + $0xc8] sm:$0xff]
        %v400 = vld [vmem:[#allocation3 + $0xd0] sm:$0xff]
        %v401 = vld [vmem:[#allocation3 + $0xd8] sm:$0xff]
        %v402 = vld [vmem:[#allocation3 + $0xe0] sm:$0xff]
        %v403 = vld [vmem:[#allocation3 + $0xe8] sm:$0xff]
        %v404 = vld [vmem:[#allocation3 + $0xf0] sm:$0xff]
        %v405 = vld [vmem:[#allocation3 + $0xf8] sm:$0xff]
        %v406 = vlaneseq
        %v407 = vshrl.u32 %v406, 7
        %v408 = vsub.s32 0, %v407
        %v409 = vrot.slane %v365, %v408
        %410 = vmatprep.subr.mxu0 0.0
        %411 = vmatpush1.msra.mxu0 %v374
        %412 = vmatprep.subr.mxu0 0.0
        %413 = vmatpush1.msra.mxu0 %v375
        %414 = vmatprep.subr.mxu0 0.0
        %415 = vmatpush1.msra.mxu0 %v376
        %416 = vmatprep.subr.mxu0 0.0
        %417 = vmatpush1.msra.mxu0 %v377
        %418 = vmatprep.subr.mxu0 0.0
        %419 = vmatpush1.msra.mxu0 %v378
        %420 = vmatprep.subr.mxu0 0.0
        %421 = vmatpush1.msra.mxu0 %v379
        %422 = vmatprep.subr.mxu0 0.0
        %423 = vmatpush1.msra.mxu0 %v380
        %424 = vmatprep.subr.mxu0 0.0
        %425 = vmatpush1.msra.mxu0 %v381
        %426 = vmatprep.subr.mxu0 0.0
        %427 = vmatpush1.msra.mxu0 %v382
        %428 = vmatprep.subr.mxu0 0.0
        %429 = vmatpush1.msra.mxu0 %v383
        %430 = vmatprep.subr.mxu0 0.0
        %431 = vmatpush1.msra.mxu0 %v384
        %432 = vmatprep.subr.mxu0 0.0
        %433 = vmatpush1.msra.mxu0 %v385
        %434 = vmatprep.subr.mxu0 0.0
        %435 = vmatpush1.msra.mxu0 %v386
        %436 = vmatprep.subr.mxu0 0.0
        %437 = vmatpush1.msra.mxu0 %v387
        %438 = vmatprep.subr.mxu0 0.0
        %439 = vmatpush1.msra.mxu0 %v388
        %440 = vmatprep.subr.mxu0 0.0
        %441 = vmatpush1.msra.mxu0 %v389
        %442 = vmatprep.subr.mxu0 0.0
        %443 = vmatpush1.msra.mxu0 %v390
        %444 = vmatprep.subr.mxu0 0.0
        %445 = vmatpush1.msra.mxu0 %v391
        %446 = vmatprep.subr.mxu0 0.0
        %447 = vmatpush1.msra.mxu0 %v392
        %448 = vmatprep.subr.mxu0 0.0
        %449 = vmatpush1.msra.mxu0 %v393
        %450 = vmatprep.subr.mxu0 0.0
        %451 = vmatpush1.msra.mxu0 %v394
        %452 = vmatprep.subr.mxu0 0.0
        %453 = vmatpush1.msra.mxu0 %v395
        %454 = vmatprep.subr.mxu0 0.0
        %455 = vmatpush1.msra.mxu0 %v396
        %456 = vmatprep.subr.mxu0 0.0
        %457 = vmatpush1.msra.mxu0 %v397
        %458 = vmatprep.subr.mxu0 0.0
        %459 = vmatpush1.msra.mxu0 %v398
        %460 = vmatprep.subr.mxu0 0.0
        %461 = vmatpush1.msra.mxu0 %v399
        %462 = vmatprep.subr.mxu0 0.0
        %463 = vmatpush1.msra.mxu0 %v400
        %464 = vmatprep.subr.mxu0 0.0
        %465 = vmatpush1.msra.mxu0 %v401
        %466 = vmatprep.subr.mxu0 0.0
        %467 = vmatpush1.msra.mxu0 %v402
        %468 = vmatprep.subr.mxu0 0.0
        %469 = vmatpush1.msra.mxu0 %v403
        %470 = vmatprep.subr.mxu0 0.0
        %471 = vmatpush1.msra.mxu0 %v404
        %472 = vmatprep.subr.mxu0 0.0
        %473 = vmatpush1.msra.mxu0 %v405
        %474 = vmatprep.mubr.f32.mxu0 %v370
        %475 = vmatmul.mubr.f32.gmra.mrb[0].mxu0 %v369
        %v476 = vpop.f32.mrb[0].mxu0
        %v477 = vadd.f32 %v409, %v476
        %v478 = vpop.f32.mrb[0].mxu0
        %479 = vdwg.mxu0
        %480 = vmatprep.subr.mxu0 0.0
        %481 = vmatpush1.msra.mxu0 %v374
        %482 = vmatprep.subr.mxu0 0.0
        %483 = vmatpush1.msra.mxu0 %v375
        %484 = vmatprep.subr.mxu0 0.0
        %485 = vmatpush1.msra.mxu0 %v376
        %486 = vmatprep.subr.mxu0 0.0
        %487 = vmatpush1.msra.mxu0 %v377
        %488 = vmatprep.subr.mxu0 0.0
        %489 = vmatpush1.msra.mxu0 %v378
        %490 = vmatprep.subr.mxu0 0.0
        %491 = vmatpush1.msra.mxu0 %v379
        %492 = vmatprep.subr.mxu0 0.0
        %493 = vmatpush1.msra.mxu0 %v380
        %494 = vmatprep.subr.mxu0 0.0
        %495 = vmatpush1.msra.mxu0 %v381
        %496 = vmatprep.subr.mxu0 0.0
        %497 = vmatpush1.msra.mxu0 %v382
        %498 = vmatprep.subr.mxu0 0.0
        %499 = vmatpush1.msra.mxu0 %v383
        %500 = vmatprep.subr.mxu0 0.0
        %501 = vmatpush1.msra.mxu0 %v384
        %502 = vmatprep.subr.mxu0 0.0
        %503 = vmatpush1.msra.mxu0 %v385
        %504 = vmatprep.subr.mxu0 0.0
        %505 = vmatpush1.msra.mxu0 %v386
        %506 = vmatprep.subr.mxu0 0.0
        %507 = vmatpush1.msra.mxu0 %v387
        %508 = vmatprep.subr.mxu0 0.0
        %509 = vmatpush1.msra.mxu0 %v388
        %510 = vmatprep.subr.mxu0 0.0
        %511 = vmatpush1.msra.mxu0 %v389
        %512 = vmatprep.subr.mxu0 0.0
        %513 = vmatpush1.msra.mxu0 %v390
        %514 = vmatprep.subr.mxu0 0.0
        %515 = vmatpush1.msra.mxu0 %v391
        %516 = vmatprep.subr.mxu0 0.0
        %517 = vmatpush1.msra.mxu0 %v392
        %518 = vmatprep.subr.mxu0 0.0
        %519 = vmatpush1.msra.mxu0 %v393
        %520 = vmatprep.subr.mxu0 0.0
        %521 = vmatpush1.msra.mxu0 %v394
        %522 = vmatprep.subr.mxu0 0.0
        %523 = vmatpush1.msra.mxu0 %v395
        %524 = vmatprep.subr.mxu0 0.0
        %525 = vmatpush1.msra.mxu0 %v396
        %526 = vmatprep.subr.mxu0 0.0
        %527 = vmatpush1.msra.mxu0 %v397
        %528 = vmatprep.subr.mxu0 0.0
        %529 = vmatpush1.msra.mxu0 %v398
        %530 = vmatprep.subr.mxu0 0.0
        %531 = vmatpush1.msra.mxu0 %v399
        %532 = vmatprep.subr.mxu0 0.0
        %533 = vmatpush1.msra.mxu0 %v400
        %534 = vmatprep.subr.mxu0 0.0
        %535 = vmatpush1.msra.mxu0 %v401
        %536 = vmatprep.subr.mxu0 0.0
        %537 = vmatpush1.msra.mxu0 %v402
        %538 = vmatprep.subr.mxu0 0.0
        %539 = vmatpush1.msra.mxu0 %v403
        %540 = vmatprep.subr.mxu0 0.0
        %541 = vmatpush1.msra.mxu0 %v404
        %542 = vmatprep.subr.mxu0 0.0
        %543 = vmatpush1.msra.mxu0 %v405
        %544 = vmatprep.mubr.f32.mxu0 %v373
        %545 = vmatmul.mubr.f32.gmra.mrb[0].mxu0 %v372
        %v546 = vpop.f32.mrb[0].mxu0
        %v547 = vadd.f32 %v409, %v546
        %v548 = vpop.f32.mrb[0].mxu0
        %549 = vdwg.mxu0
        %550 = vst [vmem:[#allocation2] sm:$0xff] 0.0
        %551 = vst [vmem:[#allocation2 + $0x8] sm:$0x1] 0.0
        %552 = vst [vmem:[#allocation2 + $0x1] sm:$0xff] %v547
        %v553 = vld [vmem:[#allocation2] sm:$0xff]
        %v554 = vld [vmem:[#allocation5] sm:$0xff]
        %v555 = vld [vmem:[#allocation5 + $0x8] sm:$0xff]
        %v556 = vld [vmem:[#allocation5 + $0x10] sm:$0xff]
        %v557 = vld [vmem:[#allocation5 + $0x18] sm:$0xff]
        %v558 = vld [vmem:[#allocation5 + $0x20] sm:$0xff]
        %v559 = vld [vmem:[#allocation5 + $0x28] sm:$0xff]
        %v560 = vld [vmem:[#allocation5 + $0x30] sm:$0xff]
        %v561 = vld [vmem:[#allocation5 + $0x38] sm:$0xff]
        %v562 = vld [vmem:[#allocation5 + $0x40] sm:$0xff]
        %v563 = vld [vmem:[#allocation5 + $0x48] sm:$0xff]
        %v564 = vld [vmem:[#allocation5 + $0x50] sm:$0xff]
        %v565 = vld [vmem:[#allocation5 + $0x58] sm:$0xff]
        %v566 = vld [vmem:[#allocation5 + $0x60] sm:$0xff]
        %v567 = vld [vmem:[#allocation5 + $0x68] sm:$0xff]
        %v568 = vld [vmem:[#allocation5 + $0x70] sm:$0xff]
        %v569 = vld [vmem:[#allocation5 + $0x78] sm:$0xff]
        %v570 = vld [vmem:[#allocation7] sm:$0xff]
        %v571 = vld [vmem:[#allocation7 + $0x8] sm:$0xff]
        %v572 = vld [vmem:[#allocation7 + $0x10] sm:$0xff]
        %v573 = vld [vmem:[#allocation7 + $0x18] sm:$0xff]
        %v574 = vld [vmem:[#allocation7 + $0x20] sm:$0xff]
        %v575 = vld [vmem:[#allocation7 + $0x28] sm:$0xff]
        %v576 = vld [vmem:[#allocation7 + $0x30] sm:$0xff]
        %v577 = vld [vmem:[#allocation7 + $0x38] sm:$0xff]
        %v578 = vld [vmem:[#allocation7 + $0x40] sm:$0xff]
        %v579 = vld [vmem:[#allocation7 + $0x48] sm:$0xff]
        %v580 = vld [vmem:[#allocation7 + $0x50] sm:$0xff]
        %v581 = vld [vmem:[#allocation7 + $0x58] sm:$0xff]
        %v582 = vld [vmem:[#allocation7 + $0x60] sm:$0xff]
        %v583 = vld [vmem:[#allocation7 + $0x68] sm:$0xff]
        %v584 = vld [vmem:[#allocation7 + $0x70] sm:$0xff]
        %v585 = vld [vmem:[#allocation7 + $0x78] sm:$0xff]
        %586 = vmatprep.subr.mxu0 0.0
        %587 = vmatpush1.msra.mxu0 %v570
        %588 = vmatprep.subr.mxu0 0.0
        %589 = vmatpush1.msra.mxu0 %v571
        %590 = vmatprep.subr.mxu0 0.0
        %591 = vmatpush1.msra.mxu0 %v572
        %592 = vmatprep.subr.mxu0 0.0
        %593 = vmatpush1.msra.mxu0 %v573
        %594 = vmatprep.subr.mxu0 0.0
        %595 = vmatpush1.msra.mxu0 %v574
        %596 = vmatprep.subr.mxu0 0.0
        %597 = vmatpush1.msra.mxu0 %v575
        %598 = vmatprep.subr.mxu0 0.0
        %599 = vmatpush1.msra.mxu0 %v576
        %600 = vmatprep.subr.mxu0 0.0
        %601 = vmatpush1.msra.mxu0 %v577
        %602 = vmatprep.subr.mxu0 0.0
        %603 = vmatpush1.msra.mxu0 %v578
        %604 = vmatprep.subr.mxu0 0.0
        %605 = vmatpush1.msra.mxu0 %v579
        %606 = vmatprep.subr.mxu0 0.0
        %607 = vmatpush1.msra.mxu0 %v580
        %608 = vmatprep.subr.mxu0 0.0
        %609 = vmatpush1.msra.mxu0 %v581
        %610 = vmatprep.subr.mxu0 0.0
        %611 = vmatpush1.msra.mxu0 %v582
        %612 = vmatprep.subr.mxu0 0.0
        %613 = vmatpush1.msra.mxu0 %v583
        %614 = vmatprep.subr.mxu0 0.0
        %615 = vmatpush1.msra.mxu0 %v584
        %616 = vmatprep.subr.mxu0 0.0
        %617 = vmatpush1.msra.mxu0 %v585
        %618 = vmatprep.subr.mxu0 0.0
        %619 = vmatpush1.msra.mxu0 0.0
        %620 = vmatprep.subr.mxu0 0.0
        %621 = vmatpush1.msra.mxu0 0.0
        %622 = vmatprep.subr.mxu0 0.0
        %623 = vmatpush1.msra.mxu0 0.0
        %624 = vmatprep.subr.mxu0 0.0
        %625 = vmatpush1.msra.mxu0 0.0
        %626 = vmatprep.subr.mxu0 0.0
        %627 = vmatpush1.msra.mxu0 0.0
        %628 = vmatprep.subr.mxu0 0.0
        %629 = vmatpush1.msra.mxu0 0.0
        %630 = vmatprep.subr.mxu0 0.0
        %631 = vmatpush1.msra.mxu0 0.0
        %632 = vmatprep.subr.mxu0 0.0
        %633 = vmatpush1.msra.mxu0 0.0
        %634 = vmatprep.subr.mxu0 0.0
        %635 = vmatpush1.msra.mxu0 0.0
        %636 = vmatprep.subr.mxu0 0.0
        %637 = vmatpush1.msra.mxu0 0.0
        %638 = vmatprep.subr.mxu0 0.0
        %639 = vmatpush1.msra.mxu0 0.0
        %640 = vmatprep.subr.mxu0 0.0
        %641 = vmatpush1.msra.mxu0 0.0
        %642 = vmatprep.subr.mxu0 0.0
        %643 = vmatpush1.msra.mxu0 0.0
        %644 = vmatprep.subr.mxu0 0.0
        %645 = vmatpush1.msra.mxu0 0.0
        %646 = vmatprep.subr.mxu0 0.0
        %647 = vmatpush1.msra.mxu0 0.0
        %648 = vmatprep.subr.mxu0 0.0
        %649 = vmatpush1.msra.mxu0 0.0
        %650 = vmatprep.mubr.f32.mxu0 0.0
        %651 = vmatmul.mubr.f32.gmra.mrb[0].mxu0 %v477
        %v652 = vpop.f32.mrb[0].mxu0
        %v653 = vadd.f32 0.0, %v652
        %v654 = vpop.f32.mrb[0].mxu0
        %655 = vdwg.mxu0
        %656 = vmatprep.subr.mxu0 0.0
        %657 = vmatpush1.msra.mxu0 %v554
        %658 = vmatprep.subr.mxu0 0.0
        %659 = vmatpush1.msra.mxu0 %v555
        %660 = vmatprep.subr.mxu0 0.0
        %661 = vmatpush1.msra.mxu0 %v556
        %662 = vmatprep.subr.mxu0 0.0
        %663 = vmatpush1.msra.mxu0 %v557
        %664 = vmatprep.subr.mxu0 0.0
        %665 = vmatpush1.msra.mxu0 %v558
        %666 = vmatprep.subr.mxu0 0.0
        %667 = vmatpush1.msra.mxu0 %v559
        %668 = vmatprep.subr.mxu0 0.0
        %669 = vmatpush1.msra.mxu0 %v560
        %670 = vmatprep.subr.mxu0 0.0
        %671 = vmatpush1.msra.mxu0 %v561
        %672 = vmatprep.subr.mxu0 0.0
        %673 = vmatpush1.msra.mxu0 %v562
        %674 = vmatprep.subr.mxu0 0.0
        %675 = vmatpush1.msra.mxu0 %v563
        %676 = vmatprep.subr.mxu0 0.0
        %677 = vmatpush1.msra.mxu0 %v564
        %678 = vmatprep.subr.mxu0 0.0
        %679 = vmatpush1.msra.mxu0 %v565
        %680 = vmatprep.subr.mxu0 0.0
        %681 = vmatpush1.msra.mxu0 %v566
        %682 = vmatprep.subr.mxu0 0.0
        %683 = vmatpush1.msra.mxu0 %v567
        %684 = vmatprep.subr.mxu0 0.0
        %685 = vmatpush1.msra.mxu0 %v568
        %686 = vmatprep.subr.mxu0 0.0
        %687 = vmatpush1.msra.mxu0 %v569
        %688 = vmatprep.subr.mxu0 0.0
        %689 = vmatpush1.msra.mxu0 0.0
        %690 = vmatprep.subr.mxu0 0.0
        %691 = vmatpush1.msra.mxu0 0.0
        %692 = vmatprep.subr.mxu0 0.0
        %693 = vmatpush1.msra.mxu0 0.0
        %694 = vmatprep.subr.mxu0 0.0
        %695 = vmatpush1.msra.mxu0 0.0
        %696 = vmatprep.subr.mxu0 0.0
        %697 = vmatpush1.msra.mxu0 0.0
        %698 = vmatprep.subr.mxu0 0.0
        %699 = vmatpush1.msra.mxu0 0.0
        %700 = vmatprep.subr.mxu0 0.0
        %701 = vmatpush1.msra.mxu0 0.0
        %702 = vmatprep.subr.mxu0 0.0
        %703 = vmatpush1.msra.mxu0 0.0
        %704 = vmatprep.subr.mxu0 0.0
        %705 = vmatpush1.msra.mxu0 0.0
        %706 = vmatprep.subr.mxu0 0.0
        %707 = vmatpush1.msra.mxu0 0.0
        %708 = vmatprep.subr.mxu0 0.0
        %709 = vmatpush1.msra.mxu0 0.0
        %710 = vmatprep.subr.mxu0 0.0
        %711 = vmatpush1.msra.mxu0 0.0
        %712 = vmatprep.subr.mxu0 0.0
        %713 = vmatpush1.msra.mxu0 0.0
        %714 = vmatprep.subr.mxu0 0.0
        %715 = vmatpush1.msra.mxu0 0.0
        %716 = vmatprep.subr.mxu0 0.0
        %717 = vmatpush1.msra.mxu0 0.0
        %718 = vmatprep.subr.mxu0 0.0
        %719 = vmatpush1.msra.mxu0 0.0
        %720 = vmatprep.mubr.f32.mxu0 0.0
        %721 = vmatmul.mubr.f32.gmra.mrb[0].mxu0 %v553
        %v722 = vpop.f32.mrb[0].mxu0
        %v723 = vadd.f32 %v653, %v722
        %v724 = vpop.f32.mrb[0].mxu0
        %725 = vdwg.mxu0
        %v726 = vld [vmem:[#allocation2 + $0x1] sm:$0xff]
        %v727 = vld [vmem:[#allocation8] sm:$0xff]
        %v728 = vld [vmem:[#allocation8 + $0x8] sm:$0xff]
        %v729 = vld [vmem:[#allocation8 + $0x10] sm:$0xff]
        %v730 = vld [vmem:[#allocation8 + $0x18] sm:$0xff]
        %v731 = vld [vmem:[#allocation8 + $0x20] sm:$0xff]
        %v732 = vld [vmem:[#allocation8 + $0x28] sm:$0xff]
        %v733 = vld [vmem:[#allocation8 + $0x30] sm:$0xff]
        %v734 = vld [vmem:[#allocation8 + $0x38] sm:$0xff]
        %v735 = vld [vmem:[#allocation8 + $0x40] sm:$0xff]
        %v736 = vld [vmem:[#allocation8 + $0x48] sm:$0xff]
        %v737 = vld [vmem:[#allocation8 + $0x50] sm:$0xff]
        %v738 = vld [vmem:[#allocation8 + $0x58] sm:$0xff]
        %v739 = vld [vmem:[#allocation8 + $0x60] sm:$0xff]
        %v740 = vld [vmem:[#allocation8 + $0x68] sm:$0xff]
        %v741 = vld [vmem:[#allocation8 + $0x70] sm:$0xff]
        %v742 = vld [vmem:[#allocation8 + $0x78] sm:$0xff]
        %743 = vmatprep.subr.mxu0 0.0
        %744 = vmatpush1.msra.mxu0 %v727
        %745 = vmatprep.subr.mxu0 0.0
        %746 = vmatpush1.msra.mxu0 %v728
        %747 = vmatprep.subr.mxu0 0.0
        %748 = vmatpush1.msra.mxu0 %v729
        %749 = vmatprep.subr.mxu0 0.0
        %750 = vmatpush1.msra.mxu0 %v730
        %751 = vmatprep.subr.mxu0 0.0
        %752 = vmatpush1.msra.mxu0 %v731
        %753 = vmatprep.subr.mxu0 0.0
        %754 = vmatpush1.msra.mxu0 %v732
        %755 = vmatprep.subr.mxu0 0.0
        %756 = vmatpush1.msra.mxu0 %v733
        %757 = vmatprep.subr.mxu0 0.0
        %758 = vmatpush1.msra.mxu0 %v734
        %759 = vmatprep.subr.mxu0 0.0
        %760 = vmatpush1.msra.mxu0 %v735
        %761 = vmatprep.subr.mxu0 0.0
        %762 = vmatpush1.msra.mxu0 %v736
        %763 = vmatprep.subr.mxu0 0.0
        %764 = vmatpush1.msra.mxu0 %v737
        %765 = vmatprep.subr.mxu0 0.0
        %766 = vmatpush1.msra.mxu0 %v738
        %767 = vmatprep.subr.mxu0 0.0
        %768 = vmatpush1.msra.mxu0 %v739
        %769 = vmatprep.subr.mxu0 0.0
        %770 = vmatpush1.msra.mxu0 %v740
        %771 = vmatprep.subr.mxu0 0.0
        %772 = vmatpush1.msra.mxu0 %v741
        %773 = vmatprep.subr.mxu0 0.0
        %774 = vmatpush1.msra.mxu0 %v742
        %775 = vmatprep.subr.mxu0 0.0
        %776 = vmatpush1.msra.mxu0 0.0
        %777 = vmatprep.subr.mxu0 0.0
        %778 = vmatpush1.msra.mxu0 0.0
        %779 = vmatprep.subr.mxu0 0.0
        %780 = vmatpush1.msra.mxu0 0.0
        %781 = vmatprep.subr.mxu0 0.0
        %782 = vmatpush1.msra.mxu0 0.0
        %783 = vmatprep.subr.mxu0 0.0
        %784 = vmatpush1.msra.mxu0 0.0
        %785 = vmatprep.subr.mxu0 0.0
        %786 = vmatpush1.msra.mxu0 0.0
        %787 = vmatprep.subr.mxu0 0.0
        %788 = vmatpush1.msra.mxu0 0.0
        %789 = vmatprep.subr.mxu0 0.0
        %790 = vmatpush1.msra.mxu0 0.0
        %791 = vmatprep.subr.mxu0 0.0
        %792 = vmatpush1.msra.mxu0 0.0
        %793 = vmatprep.subr.mxu0 0.0
        %794 = vmatpush1.msra.mxu0 0.0
        %795 = vmatprep.subr.mxu0 0.0
        %796 = vmatpush1.msra.mxu0 0.0
        %797 = vmatprep.subr.mxu0 0.0
        %798 = vmatpush1.msra.mxu0 0.0
        %799 = vmatprep.subr.mxu0 0.0
        %800 = vmatpush1.msra.mxu0 0.0
        %801 = vmatprep.subr.mxu0 0.0
        %802 = vmatpush1.msra.mxu0 0.0
        %803 = vmatprep.subr.mxu0 0.0
        %804 = vmatpush1.msra.mxu0 0.0
        %805 = vmatprep.subr.mxu0 0.0
        %806 = vmatpush1.msra.mxu0 0.0
        %807 = vmatprep.mubr.f32.mxu0 0.0
        %808 = vmatmul.mubr.f32.gmra.mrb[0].mxu0 %v726
        %v809 = vpop.f32.mrb[0].mxu0
        %v810 = vadd.f32 0.0, %v809
        %v811 = vpop.f32.mrb[0].mxu0
        %812 = vdwg.mxu0
        %v813 = vadd.f32 %v723, %v810
        %v814 = vlaneseq
        %v815 = vshrl.u32 %v814, 7
        %v816 = vsub.s32 0, %v815
        %v817 = vrot.slane %v366, %v816
        %v818 = vadd.f32 %v813, %v817
        %v819 = vld [vmem:[%s5] sm:$0xff]
        %v820 = vld [vmem:[%s5 + $0x8] sm:$0xff]
        %v821 = vld [vmem:[%s5 + $0x10] sm:$0xff]
        %v822 = vld [vmem:[%s5 + $0x18] sm:$0xff]
        %v823 = vld [vmem:[%s5 + $0x20] sm:$0xff]
        %v824 = vld [vmem:[%s5 + $0x28] sm:$0xff]
        %v825 = vld [vmem:[%s5 + $0x30] sm:$0xff]
        %v826 = vld [vmem:[%s5 + $0x38] sm:$0xff]
        %v827 = vld [vmem:[%s5 + $0x40] sm:$0xff]
        %v828 = vld [vmem:[%s5 + $0x48] sm:$0xff]
        %v829 = vld [vmem:[%s5 + $0x50] sm:$0xff]
        %v830 = vld [vmem:[%s5 + $0x58] sm:$0xff]
        %v831 = vld [vmem:[%s5 + $0x60] sm:$0xff]
        %v832 = vld [vmem:[%s5 + $0x68] sm:$0xff]
        %v833 = vld [vmem:[%s5 + $0x70] sm:$0xff]
        %v834 = vld [vmem:[%s5 + $0x78] sm:$0xff]
        %v836 = vlaneseq
        %v837 = vshrl.u32 %v836, 7
        %v838 = vsub.s32 0, %v837
        %v839 = vrot.slane %v368, %v838
        %v840 = vlaneseq
        %v841 = vshrl.u32 %v840, 7
        %v842 = vsub.s32 1, %v841
        %v843 = vrot.slane %v368, %v842
        %vm846 = vcmask 523264
        %v848 = vsel %vm846, %v818, 0
        %850 = vmatprep.subr.mxu0 %v820
        %851 = vmatpush1.msra.mxu0 %v819
        %852 = vmatprep.subr.mxu0 %v822
        %853 = vmatpush1.msra.mxu0 %v821
        %854 = vmatprep.subr.mxu0 %v824
        %855 = vmatpush1.msra.mxu0 %v823
        %856 = vmatprep.subr.mxu0 %v826
        %857 = vmatpush1.msra.mxu0 %v825
        %858 = vmatprep.subr.mxu0 %v828
        %859 = vmatpush1.msra.mxu0 %v827
        %860 = vmatprep.subr.mxu0 %v830
        %861 = vmatpush1.msra.mxu0 %v829
        %862 = vmatprep.subr.mxu0 %v832
        %863 = vmatpush1.msra.mxu0 %v831
        %864 = vmatprep.subr.mxu0 %v834
        %865 = vmatpush1.msra.mxu0 %v833
        %866 = vmatprep.subr.mxu0 0.0
        %867 = vmatpush1.msra.mxu0 0.0
        %868 = vmatprep.subr.mxu0 0.0
        %869 = vmatpush1.msra.mxu0 0.0
        %870 = vmatprep.subr.mxu0 0.0
        %871 = vmatpush1.msra.mxu0 0.0
        %872 = vmatprep.subr.mxu0 0.0
        %873 = vmatpush1.msra.mxu0 0.0
        %874 = vmatprep.subr.mxu0 0.0
        %875 = vmatpush1.msra.mxu0 0.0
        %876 = vmatprep.subr.mxu0 0.0
        %877 = vmatpush1.msra.mxu0 0.0
        %878 = vmatprep.subr.mxu0 0.0
        %879 = vmatpush1.msra.mxu0 0.0
        %880 = vmatprep.subr.mxu0 0.0
        %881 = vmatpush1.msra.mxu0 0.0
        %882 = vmatprep.subr.mxu0 0.0
        %883 = vmatpush1.msra.mxu0 0.0
        %884 = vmatprep.subr.mxu0 0.0
        %885 = vmatpush1.msra.mxu0 0.0
        %886 = vmatprep.subr.mxu0 0.0
        %887 = vmatpush1.msra.mxu0 0.0
        %888 = vmatprep.subr.mxu0 0.0
        %889 = vmatpush1.msra.mxu0 0.0
        %890 = vmatprep.subr.mxu0 0.0
        %891 = vmatpush1.msra.mxu0 0.0
        %892 = vmatprep.subr.mxu0 0.0
        %893 = vmatpush1.msra.mxu0 0.0
        %894 = vmatprep.subr.mxu0 0.0
        %895 = vmatpush1.msra.mxu0 0.0
        %896 = vmatprep.subr.mxu0 0.0
        %897 = vmatpush1.msra.mxu0 0.0
        %898 = vmatprep.subr.mxu0 0.0
        %899 = vmatpush1.msra.mxu0 0.0
        %900 = vmatprep.subr.mxu0 0.0
        %901 = vmatpush1.msra.mxu0 0.0
        %902 = vmatprep.subr.mxu0 0.0
        %903 = vmatpush1.msra.mxu0 0.0
        %904 = vmatprep.subr.mxu0 0.0
        %905 = vmatpush1.msra.mxu0 0.0
        %906 = vmatprep.subr.mxu0 0.0
        %907 = vmatpush1.msra.mxu0 0.0
        %908 = vmatprep.subr.mxu0 0.0
        %909 = vmatpush1.msra.mxu0 0.0
        %910 = vmatprep.subr.mxu0 0.0
        %911 = vmatpush1.msra.mxu0 0.0
        %912 = vmatprep.subr.mxu0 0.0
        %913 = vmatpush1.msra.mxu0 0.0
        %914 = vmatprep.mubr.f32.mxu0 0.0
        %915 = vmatmul.mubr.f32.gmra.mrb[0].mxu0 %v848
        %v916 = vpop.f32.mrb[0].mxu0
        %v917 = vadd.f32 %v839, %v916
        %v918 = vpop.f32.mrb[0].mxu0
        %v919 = vadd.f32 %v843, %v918
        %920 = vdwg.mxu0
        %v921 = vmax.f32 %v917, 0.0
        %v922 = vmax.f32 %v919, 0.0
        %s923 = scalar_lea.vmem %s7, 3
        %v924 = vld [vmem:[%s923] ss:$4 sm:$0x3]
        %v925 = vld [vmem:[%s6] sm:$0xff]
        %v926 = vld [vmem:[%s6 + $0x8] sm:$0xff]
        %v927 = vld [vmem:[%s6 + $0x10] sm:$0xff]
        %v928 = vld [vmem:[%s6 + $0x18] sm:$0xff]
        %v929 = vld [vmem:[%s6 + $0x20] sm:$0xff]
        %v930 = vld [vmem:[%s6 + $0x28] sm:$0xff]
        %v931 = vld [vmem:[%s6 + $0x30] sm:$0xff]
        %v932 = vld [vmem:[%s6 + $0x38] sm:$0xff]
        %v933 = vld [vmem:[%s6 + $0x40] sm:$0xff]
        %v934 = vld [vmem:[%s6 + $0x48] sm:$0xff]
        %v935 = vld [vmem:[%s6 + $0x50] sm:$0xff]
        %v936 = vld [vmem:[%s6 + $0x58] sm:$0xff]
        %v937 = vld [vmem:[%s6 + $0x60] sm:$0xff]
        %v938 = vld [vmem:[%s6 + $0x68] sm:$0xff]
        %v939 = vld [vmem:[%s6 + $0x70] sm:$0xff]
        %v940 = vld [vmem:[%s6 + $0x78] sm:$0xff]
        %v941 = vld [vmem:[%s6 + $0x80] sm:$0xff]
        %v942 = vld [vmem:[%s6 + $0x88] sm:$0xff]
        %v943 = vld [vmem:[%s6 + $0x90] sm:$0xff]
        %v944 = vld [vmem:[%s6 + $0x98] sm:$0xff]
        %v945 = vld [vmem:[%s6 + $0xa0] sm:$0xff]
        %v946 = vld [vmem:[%s6 + $0xa8] sm:$0xff]
        %v947 = vld [vmem:[%s6 + $0xb0] sm:$0xff]
        %v948 = vld [vmem:[%s6 + $0xb8] sm:$0xff]
        %v949 = vld [vmem:[%s6 + $0xc0] sm:$0xff]
        %v950 = vld [vmem:[%s6 + $0xc8] sm:$0xff]
        %v951 = vld [vmem:[%s6 + $0xd0] sm:$0xff]
        %v952 = vld [vmem:[%s6 + $0xd8] sm:$0xff]
        %v953 = vld [vmem:[%s6 + $0xe0] sm:$0xff]
        %v954 = vld [vmem:[%s6 + $0xe8] sm:$0xff]
        %v955 = vld [vmem:[%s6 + $0xf0] sm:$0xff]
        %v956 = vld [vmem:[%s6 + $0xf8] sm:$0xff]
        %v957 = vld [vmem:[%s6 + $0x100] sm:$0xff]
        %v958 = vld [vmem:[%s6 + $0x108] sm:$0xff]
        %v959 = vld [vmem:[%s6 + $0x110] sm:$0xff]
        %v960 = vld [vmem:[%s6 + $0x118] sm:$0xff]
        %v961 = vld [vmem:[%s6 + $0x120] sm:$0xff]
        %v962 = vld [vmem:[%s6 + $0x128] sm:$0xff]
        %v963 = vld [vmem:[%s6 + $0x130] sm:$0xff]
        %v964 = vld [vmem:[%s6 + $0x138] sm:$0xff]
        %v965 = vld [vmem:[%s6 + $0x140] sm:$0xff]
        %v966 = vld [vmem:[%s6 + $0x148] sm:$0xff]
        %v967 = vld [vmem:[%s6 + $0x150] sm:$0xff]
        %v968 = vld [vmem:[%s6 + $0x158] sm:$0xff]
        %v969 = vld [vmem:[%s6 + $0x160] sm:$0xff]
        %v970 = vld [vmem:[%s6 + $0x168] sm:$0xff]
        %v971 = vld [vmem:[%s6 + $0x170] sm:$0xff]
        %v972 = vld [vmem:[%s6 + $0x178] sm:$0xff]
        %v973 = vld [vmem:[%s6 + $0x180] sm:$0xff]
        %v974 = vld [vmem:[%s6 + $0x188] sm:$0xff]
        %v975 = vld [vmem:[%s6 + $0x190] sm:$0xff]
        %v976 = vld [vmem:[%s6 + $0x198] sm:$0xff]
        %v977 = vld [vmem:[%s6 + $0x1a0] sm:$0xff]
        %v978 = vld [vmem:[%s6 + $0x1a8] sm:$0xff]
        %v979 = vld [vmem:[%s6 + $0x1b0] sm:$0xff]
        %v980 = vld [vmem:[%s6 + $0x1b8] sm:$0xff]
        %v981 = vld [vmem:[%s6 + $0x1c0] sm:$0xff]
        %v982 = vld [vmem:[%s6 + $0x1c8] sm:$0xff]
        %v983 = vld [vmem:[%s6 + $0x1d0] sm:$0xff]
        %v984 = vld [vmem:[%s6 + $0x1d8] sm:$0xff]
        %v985 = vld [vmem:[%s6 + $0x1e0] sm:$0xff]
        %v986 = vld [vmem:[%s6 + $0x1e8] sm:$0xff]
        %v987 = vld [vmem:[%s6 + $0x1f0] sm:$0xff]
        %v988 = vld [vmem:[%s6 + $0x1f8] sm:$0xff]
        %v990 = vlaneseq
        %v991 = vshrl.u32 %v990, 7
        %v992 = vsub.s32 0, %v991
        %v993 = vrot.slane %v924, %v992
        %v994 = vlaneseq
        %v995 = vshrl.u32 %v994, 7
        %v996 = vsub.s32 1, %v995
        %v997 = vrot.slane %v924, %v996
        %1000 = vmatprep.subr.mxu0 %v926
        %1001 = vmatpush1.msra.mxu0 %v925
        %1002 = vmatprep.subr.mxu0 %v928
        %1003 = vmatpush1.msra.mxu0 %v927
        %1004 = vmatprep.subr.mxu0 %v930
        %1005 = vmatpush1.msra.mxu0 %v929
        %1006 = vmatprep.subr.mxu0 %v932
        %1007 = vmatpush1.msra.mxu0 %v931
        %1008 = vmatprep.subr.mxu0 %v934
        %1009 = vmatpush1.msra.mxu0 %v933
        %1010 = vmatprep.subr.mxu0 %v936
        %1011 = vmatpush1.msra.mxu0 %v935
        %1012 = vmatprep.subr.mxu0 %v938
        %1013 = vmatpush1.msra.mxu0 %v937
        %1014 = vmatprep.subr.mxu0 %v940
        %1015 = vmatpush1.msra.mxu0 %v939
        %1016 = vmatprep.subr.mxu0 %v942
        %1017 = vmatpush1.msra.mxu0 %v941
        %1018 = vmatprep.subr.mxu0 %v944
        %1019 = vmatpush1.msra.mxu0 %v943
        %1020 = vmatprep.subr.mxu0 %v946
        %1021 = vmatpush1.msra.mxu0 %v945
        %1022 = vmatprep.subr.mxu0 %v948
        %1023 = vmatpush1.msra.mxu0 %v947
        %1024 = vmatprep.subr.mxu0 %v950
        %1025 = vmatpush1.msra.mxu0 %v949
        %1026 = vmatprep.subr.mxu0 %v952
        %1027 = vmatpush1.msra.mxu0 %v951
        %1028 = vmatprep.subr.mxu0 %v954
        %1029 = vmatpush1.msra.mxu0 %v953
        %1030 = vmatprep.subr.mxu0 %v956
        %1031 = vmatpush1.msra.mxu0 %v955
        %1032 = vmatprep.subr.mxu0 %v958
        %1033 = vmatpush1.msra.mxu0 %v957
        %1034 = vmatprep.subr.mxu0 %v960
        %1035 = vmatpush1.msra.mxu0 %v959
        %1036 = vmatprep.subr.mxu0 %v962
        %1037 = vmatpush1.msra.mxu0 %v961
        %1038 = vmatprep.subr.mxu0 %v964
        %1039 = vmatpush1.msra.mxu0 %v963
        %1040 = vmatprep.subr.mxu0 %v966
        %1041 = vmatpush1.msra.mxu0 %v965
        %1042 = vmatprep.subr.mxu0 %v968
        %1043 = vmatpush1.msra.mxu0 %v967
        %1044 = vmatprep.subr.mxu0 %v970
        %1045 = vmatpush1.msra.mxu0 %v969
        %1046 = vmatprep.subr.mxu0 %v972
        %1047 = vmatpush1.msra.mxu0 %v971
        %1048 = vmatprep.subr.mxu0 %v974
        %1049 = vmatpush1.msra.mxu0 %v973
        %1050 = vmatprep.subr.mxu0 %v976
        %1051 = vmatpush1.msra.mxu0 %v975
        %1052 = vmatprep.subr.mxu0 %v978
        %1053 = vmatpush1.msra.mxu0 %v977
        %1054 = vmatprep.subr.mxu0 %v980
        %1055 = vmatpush1.msra.mxu0 %v979
        %1056 = vmatprep.subr.mxu0 %v982
        %1057 = vmatpush1.msra.mxu0 %v981
        %1058 = vmatprep.subr.mxu0 %v984
        %1059 = vmatpush1.msra.mxu0 %v983
        %1060 = vmatprep.subr.mxu0 %v986
        %1061 = vmatpush1.msra.mxu0 %v985
        %1062 = vmatprep.subr.mxu0 %v988
        %1063 = vmatpush1.msra.mxu0 %v987
        %1064 = vmatprep.mubr.f32.mxu0 %v370
        %1065 = vmatmul.mubr.f32.gmra.mrb[0].mxu0 %v369
        %v1066 = vpop.f32.mrb[0].mxu0
        %v1067 = vadd.f32 %v993, %v1066
        %v1068 = vpop.f32.mrb[0].mxu0
        %v1069 = vadd.f32 %v997, %v1068
        %1070 = vdwg.mxu0
        %v1071 = vadd.f32 %v921, %v1067
        %v1072 = vadd.f32 %v922, %v1069
        %1073 = vst [vmem:[%s364] sm:$0xff] %v1071
        %1074 = vst [vmem:[%s364 + $0x8] sm:$0xff] %v1072
        %p1075 = scmp.lt.s32.totalorder %s22, 1
        %s1076 = scalar_select %p1075, %s22, 1
        %s1077 = smul.addr %s1076, 2
        %s1078 = smul.addr %s1077, 8
        %s1079 = scalar_lea.vmem %s8, %s1078
        // Predicated region
        $region69: #{_lambda_.2} parent=51 // pred_check
          %p1080 = pneg %p213
        $region70: #{_lambda_.2} parent=51 // pred_check_branch
          %1082 = sbr.rel (%p1080) target = $region72
        $region71: #{_lambda_.2} parent=51 // pred_region
          _
        $region72: #{_lambda_.2} parent=51 // pred_fallthru
          _
      $region52: #{_lambda_.2} parent=5 // pred_fallthru
        _
      %p1083 = scmp.le.s32.totalorder 2, %s17
      // Predicated region
      $region73: #{_lambda_.2} parent=5 // pred_check
        %p1084 = pneg %p1083
      $region74: #{_lambda_.2} parent=5 // pred_check_branch
        %1086 = sbr.rel (%p1084) target = $region76
      $region75: #{_lambda_.2} parent=5 // pred_region
        %s1087 = ssub.s32 %s17, 2
        // Predicated region
        $region77: #{_lambda_.2} parent=75 // pred_check
          %p1088 = pneg %p219
        $region78: #{_lambda_.2} parent=75 // pred_check_branch
          %1090 = sbr.rel (%p1088) target = $region80
        $region79: #{_lambda_.2} parent=75 // pred_region
          %p1091 = scmp.lt.s32.totalorder %s23, 1
          %s1092 = scalar_select %p1091, %s23, 1
          %s1093 = smul.addr %s1092, 2
          %s1094 = smul.addr %s1093, 8
          %s1095 = scalar_lea.vmem %s8, %s1094
        $region80: #{_lambda_.2} parent=75 // pred_fallthru
          _
      $region76: #{_lambda_.2} parent=5 // pred_fallthru
        _
    $region6: #{_lambda_.2} parent=1 // loop_footer
      %s21 = sadd.s32 1, %s17
    $region7: #{_lambda_.2} parent=1 // loop_footer_branch
      %16 = sbr.rel target = $region3
    $region8: #{_lambda_.2} parent=1 // loop_exit
      _
    %1096 = vsyncpa [#allocation4], 1
    %s1097 = scalar_lea.sflag [#allocation4], 1
    %1098 = vsyncpa %s1097, 1
    %1099 = vsyncpa [#allocation6], 1
    %1100 = vsyncpa [#allocation9], 1

</llo_original>
